<compile_context>
chip_gen: v5e
topology: v5e:2x2
jax: 0.10.0
libtpu: 0.0.40
codegen_flags: <defaults>
</compile_context>

<pallas_src>
import functools
import math

import jax
import jax.numpy as jnp
from jax.experimental import pallas as pl
from jax.experimental.pallas import tpu as pltpu


_HEAD_PAD = 128   # lane-dense output / bias-slab width


# -----------------------------------------------------------------------------
# F.interpolate(x, (H//r, W//r), mode='nearest') as XLA glue (no Pallas kernel)
# -----------------------------------------------------------------------------
def nearest_downsample(x, r):
    N, C, H, W = x.shape
    Ho, Wo = H // r, W // r
    if H % r == 0 and W % r == 0:
        return x[:, :, ::r, ::r]                      # fuses with patch glue
    # non-divisible case: PyTorch nearest picks src = floor(dst * in / out)
    ri = (jnp.arange(Ho) * H) // Ho
    ci = (jnp.arange(Wo) * W) // Wo
    return x[:, :, ri[:, None], ci[None, :]]


# -----------------------------------------------------------------------------
# Fused YOLOS-style encoder + detection heads (one image per grid step).
#   patch-embed -> [LN -> MHSA -> +res -> LN -> MLP -> +res] x L -> LN ->
#   class head + 3-layer box head on the 8 det-token rows (128-lane slabs).
# All weights + activations stay resident in VMEM for the whole forward pass.
# -----------------------------------------------------------------------------
def _yolos_fused_kernel(pp_ref, base_ref, patch_w_ref, wqkv_ref, wo_ref,
                        w1_ref, w2_ref, cls_w_ref, box_w1_ref, box_w2_ref,
                        box_w3_ref, bias_ref,
                        logits_ref, boxes_ref,
                        *, n_layers, n_heads, n_det, pad_lo, pad_hi, eps):
    f32 = jnp.float32

    # patch embedding; cls/det tokens, positional emb, patch bias baked in `base`
    tok = jnp.dot(pp_ref[0], patch_w_ref[...],
                  preferred_element_type=f32) + base_ref[...]        # (S, D)
    S, D = tok.shape
    M = w1_ref.shape[-1]
    dh = D // n_heads
    scale = 1.0 / math.sqrt(dh)

    def brow(r, n):                      # one 128-lane row of the bias slab
        return bias_ref[r:r + 1, :n]     # static slice -> (1, n), free

    # additive key mask for the zero rows inserted to pad S to a sublane multiple
    if pad_hi > pad_lo:
        col = jax.lax.broadcasted_iota(jnp.int32, (S, S), 1)
        key_mask = jnp.where((col >= pad_lo) & (col < pad_hi), -1e30, 0.0)
    else:
        key_mask = None

    def layernorm(v, g, b):              # one-pass mean / mean-of-squares
        mu = jnp.mean(v, axis=-1, keepdims=True)
        ms = jnp.mean(v * v, axis=-1, keepdims=True)
        return (v - mu) * jax.lax.rsqrt(ms - mu * mu + eps) * g + b

    for l in range(n_layers):                               # static unroll
        r0 = l * 8
        h = layernorm(tok, brow(r0 + 0, D), brow(r0 + 1, D))

        # --- attention: one fused QKV matmul per layer -----------------------
        qkv = jnp.dot(h, wqkv_ref[l],
                      preferred_element_type=f32) + brow(r0 + 2, 3 * D)  # (S,3D)
        heads = []
        for hh in range(n_heads):                           # static unroll
            qh = qkv[:, hh * dh:(hh + 1) * dh]
            kh = qkv[:, D + hh * dh:D + (hh + 1) * dh]
            vh = qkv[:, 2 * D + hh * dh:2 * D + (hh + 1) * dh]
            s = jax.lax.dot_general(qh, kh, (((1,), (1,)), ((), ())),
                                    preferred_element_type=f32) * scale  # (S,S)
            if key_mask is not None:
                s = s + key_mask
            s = s - jnp.max(s, axis=-1, keepdims=True)
            p = jnp.exp(s)
            p = p / jnp.sum(p, axis=-1, keepdims=True)      # exact (f32 parity)
            heads.append(jnp.dot(p, vh, preferred_element_type=f32))    # (S,dh)
        ctx = jnp.concatenate(heads, axis=-1)                            # (S,D)
        # single concat-heads out-projection
        tok = tok + jnp.dot(ctx, wo_ref[l],
                            preferred_element_type=f32) + brow(r0 + 3, D)

        # --- MLP --------------------------------------------------------------
        h2 = layernorm(tok, brow(r0 + 4, D), brow(r0 + 5, D))
        m = jax.nn.gelu(jnp.dot(h2, w1_ref[l],
                                preferred_element_type=f32) + brow(r0 + 6, M))
        tok = tok + jnp.dot(m, w2_ref[l],
                            preferred_element_type=f32) + brow(r0 + 7, D)

    rf = n_layers * 8
    tok = layernorm(tok, brow(rf + 0, D), brow(rf + 1, D))

    # heads on the det-token rows only (aligned (n_det, D) slice); weights are
    # zero-padded to 128 output columns -> lane-dense, unmasked stores.
    det = tok[S - n_det:, :]                                            # (8, D)
    logits_ref[0] = jnp.dot(det, cls_w_ref[...],
                            preferred_element_type=f32) + brow(rf + 2, _HEAD_PAD)
    bh = jnp.maximum(jnp.dot(det, box_w1_ref[...],
                             preferred_element_type=f32) + brow(rf + 3, D), 0.0)
    bh = jnp.maximum(jnp.dot(bh, box_w2_ref[...],
                             preferred_element_type=f32) + brow(rf + 4, D), 0.0)
    boxes_ref[0] = jax.nn.sigmoid(
        jnp.dot(bh, box_w3_ref[...],
                preferred_element_type=f32) + brow(rf + 5, _HEAD_PAD))


# -----------------------------------------------------------------------------
# Synthetic YOLOS-tiny-style model (ViT encoder + detection tokens + heads)
# -----------------------------------------------------------------------------
CFG = dict(
    in_ch=3, patch=8, hidden=32, heads=2, layers=2, mlp=64,
    num_det_tokens=8, num_labels=4,
)


def init_params(cfg, seq_len):
    D = cfg["hidden"]
    patch_dim = cfg["in_ch"] * cfg["patch"] * cfg["patch"]
    kc = [0]

    def nrm(shape, scale=0.02):
        kc[0] += 1
        return scale * jax.random.normal(jax.random.PRNGKey(kc[0]), shape,
                                         dtype=jnp.float32)

    p = {}
    p["patch_w"] = nrm((patch_dim, D))
    p["patch_b"] = jnp.zeros((D,), jnp.float32)
    p["cls_tok"] = nrm((1, 1, D))
    p["det_tok"] = nrm((1, cfg["num_det_tokens"], D))
    p["pos_emb"] = nrm((1, seq_len, D))
    p["layers"] = []
    for _ in range(cfg["layers"]):
        p["layers"].append(dict(
            ln1_g=jnp.ones((D,), jnp.float32), ln1_b=jnp.zeros((D,), jnp.float32),
            wqkv=nrm((D, 3 * D)), bqkv=jnp.zeros((3 * D,), jnp.float32),
            wo=nrm((D, D)), bo=jnp.zeros((D,), jnp.float32),
            ln2_g=jnp.ones((D,), jnp.float32), ln2_b=jnp.zeros((D,), jnp.float32),
            w1=nrm((D, cfg["mlp"])), b1=jnp.zeros((cfg["mlp"],), jnp.float32),
            w2=nrm((cfg["mlp"], D)), b2=jnp.zeros((D,), jnp.float32),
        ))
    p["lnf_g"] = jnp.ones((D,), jnp.float32)
    p["lnf_b"] = jnp.zeros((D,), jnp.float32)
    p["cls_w"] = nrm((D, cfg["num_labels"] + 1))
    p["cls_b"] = jnp.zeros((cfg["num_labels"] + 1,), jnp.float32)
    p["box_w1"] = nrm((D, D)); p["box_b1"] = jnp.zeros((D,), jnp.float32)
    p["box_w2"] = nrm((D, D)); p["box_b2"] = jnp.zeros((D,), jnp.float32)
    p["box_w3"] = nrm((D, 4)); p["box_b3"] = jnp.zeros((4,), jnp.float32)
    return p


def yolos_forward(params, x, cfg):
    """x: (B, C, H, W) float32 (already downsampled)."""
    B, C, H, W = x.shape
    ps, D, nh = cfg["patch"], cfg["hidden"], cfg["heads"]
    L, ND = cfg["layers"], cfg["num_det_tokens"]
    ncls = cfg["num_labels"] + 1
    gh, gw = H // ps, W // ps
    nP = gh * gw
    Pd = C * ps * ps
    S_real = 1 + nP + ND
    S = pl.cdiv(S_real, 8) * 8                 # pad seq to sublane multiple (16)
    pad_lo, pad_hi = 1 + nP, S - ND            # inserted zero-row band (masked)

    # ---- glue: patch extraction + padding (pure XLA data movement) ----------
    patches = x.reshape(B, C, gh, ps, gw, ps)
    patches = patches.transpose(0, 2, 4, 1, 3, 5).reshape(B, nP, Pd)
    pp = jnp.pad(patches, ((0, 0), (1, S - 1 - nP), (0, 0)))          # (B, S, Pd)

    # batch-independent token base: [cls ; patch_bias rows ; det] + pos_emb,
    # with zero rows inserted so det tokens occupy the last ND (=8) rows.
    base_real = jnp.concatenate([
        params["cls_tok"][0],
        jnp.broadcast_to(params["patch_b"][None, :], (nP, D)),
        params["det_tok"][0],
    ], axis=0) + params["pos_emb"][0, :S_real, :]
    base = jnp.concatenate([
        base_real[:1 + nP],
        jnp.zeros((S - S_real, D), jnp.float32),
        base_real[1 + nP:],
    ], axis=0)                                                        # (S, D)

    def stk(name):
        return jnp.stack([lyr[name] for lyr in params["layers"]], axis=0)

    wqkv = stk("wqkv")                     # (L, D, 3D) fused QKV
    wo = stk("wo")                         # (L, D, D)  concat-heads out-proj
    w1 = stk("w1")
    w2 = stk("w2")

    # pack every tiny bias/gamma/beta vector into ONE 128-lane-padded slab
    def row(v):
        return jnp.pad(v, (0, _HEAD_PAD - v.shape[0]))[None, :]

    rows = []
    for lyr in params["layers"]:
        rows += [row(lyr["ln1_g"]), row(lyr["ln1_b"]), row(lyr["bqkv"]),
                 row(lyr["bo"]), row(lyr["ln2_g"]), row(lyr["ln2_b"]),
                 row(lyr["b1"]), row(lyr["b2"])]
    rows += [row(params["lnf_g"]), row(params["lnf_b"]), row(params["cls_b"]),
             row(params["box_b1"]), row(params["box_b2"]), row(params["box_b3"])]
    n_rows = len(rows)
    bias = jnp.concatenate(rows, axis=0)
    bias = jnp.pad(bias, ((0, pl.cdiv(n_rows, 8) * 8 - n_rows), (0, 0)))

    # head weights zero-padded to 128 output columns -> lane-dense stores
    cls_w = jnp.pad(params["cls_w"], ((0, 0), (0, _HEAD_PAD - ncls)))
    box_w3 = jnp.pad(params["box_w3"], ((0, 0), (0, _HEAD_PAD - 4)))

    weights = [base, params["patch_w"], wqkv, wo, w1, w2,
               cls_w, params["box_w1"], params["box_w2"], box_w3, bias]

    # TODO(synk): at real yolos-tiny scale (D=192, L=12), mark these
    # constant-index specs pipeline_mode=pl.Buffered(1) and set
    # vmem_limit_bytes so double-buffered weights fit v7x's 64 MiB VMEM;
    # irrelevant at this toy size.
    def _const(shape):
        nd = len(shape)
        return pl.BlockSpec(tuple(shape), lambda b, _nd=nd: (0,) * _nd)

    logits_pad, boxes_pad = pl.pallas_call(
        functools.partial(_yolos_fused_kernel, n_layers=L, n_heads=nh,
                          n_det=ND, pad_lo=pad_lo, pad_hi=pad_hi, eps=1e-12),
        out_shape=(jax.ShapeDtypeStruct((B, ND, _HEAD_PAD), jnp.float32),
                   jax.ShapeDtypeStruct((B, ND, _HEAD_PAD), jnp.float32)),
        grid=(B,),
        in_specs=[pl.BlockSpec((1, S, Pd), lambda b: (b, 0, 0))]
                 + [_const(w.shape) for w in weights],
        out_specs=(pl.BlockSpec((1, ND, _HEAD_PAD), lambda b: (b, 0, 0)),
                   pl.BlockSpec((1, ND, _HEAD_PAD), lambda b: (b, 0, 0))),
        compiler_params=pltpu.CompilerParams(
            dimension_semantics=("parallel",)),
    )(pp, *weights)

    return {"logits": logits_pad[:, :, :ncls],
            "pred_boxes": boxes_pad[:, :, :4]}


# -----------------------------------------------------------------------------
# Inferencer.forward equivalent
# -----------------------------------------------------------------------------
def inferencer_forward(params, x, resize_factor=4, cfg=CFG):
    x_small = nearest_downsample(x, resize_factor)   # F.interpolate, nearest (XLA)
    return yolos_forward(params, x_small, cfg)


if __name__ == "__main__":
    cfg = CFG
    B, C, H, W = 2, 3, 64, 64                 # after //4 -> (2,3,16,16), 2x2 patches
    r = 4
    x = jax.random.normal(jax.random.PRNGKey(0), (B, C, H, W), dtype=jnp.float32)

    seq_len = (1 + (H // r // cfg["patch"]) * (W // r // cfg["patch"])
               + cfg["num_det_tokens"])
    params = init_params(cfg, seq_len)

    fwd = jax.jit(functools.partial(inferencer_forward, resize_factor=r))
    out = fwd(params, x)
    jax.block_until_ready(out)

    assert out["logits"].shape == (B, cfg["num_det_tokens"], cfg["num_labels"] + 1)
    assert out["pred_boxes"].shape == (B, cfg["num_det_tokens"], 4)
    assert bool(jnp.all(jnp.isfinite(out["logits"])))
    assert bool(jnp.all(jnp.isfinite(out["pred_boxes"])))
    assert bool(jnp.all((out["pred_boxes"] >= 0.0) & (out["pred_boxes"] <= 1.0)))
    print("KERNEL_OK")
</pallas_src>

<mosaic_0001>
module attributes {stable_mosaic.version = 11 : i64} {
  func.func @_yolos_fused_kernel(%arg0: i32, %arg1: memref<1x16x192xf32, #tpu.memory_space<vmem>>, %arg2: memref<16x32xf32, #tpu.memory_space<vmem>>, %arg3: memref<192x32xf32, #tpu.memory_space<vmem>>, %arg4: memref<2x32x96xf32, #tpu.memory_space<vmem>>, %arg5: memref<2x32x32xf32, #tpu.memory_space<vmem>>, %arg6: memref<2x32x64xf32, #tpu.memory_space<vmem>>, %arg7: memref<2x64x32xf32, #tpu.memory_space<vmem>>, %arg8: memref<32x128xf32, #tpu.memory_space<vmem>>, %arg9: memref<32x32xf32, #tpu.memory_space<vmem>>, %arg10: memref<32x32xf32, #tpu.memory_space<vmem>>, %arg11: memref<32x128xf32, #tpu.memory_space<vmem>>, %arg12: memref<24x128xf32, #tpu.memory_space<vmem>>, %arg13: memref<1x8x128xf32, #tpu.memory_space<vmem>>, %arg14: memref<1x8x128xf32, #tpu.memory_space<vmem>>) attributes {dimension_semantics = [#tpu.dimension_semantics<parallel>], iteration_bounds = array<i64: 2>, scalar_prefetch = 0 : i64, scratch_operands = 0 : i64, tpu.core_type = #tpu.core_type<tc>, window_params = [{transform_indices = @transform_0, window_bounds = array<i64: 1, 16, 192>}, {pipeline_mode = #tpu.pipeline_mode<synchronous>, transform_indices = @transform_1, window_bounds = array<i64: 16, 32>}, {pipeline_mode = #tpu.pipeline_mode<synchronous>, transform_indices = @transform_2, window_bounds = array<i64: 192, 32>}, {pipeline_mode = #tpu.pipeline_mode<synchronous>, transform_indices = @transform_3, window_bounds = array<i64: 2, 32, 96>}, {pipeline_mode = #tpu.pipeline_mode<synchronous>, transform_indices = @transform_4, window_bounds = array<i64: 2, 32, 32>}, {pipeline_mode = #tpu.pipeline_mode<synchronous>, transform_indices = @transform_5, window_bounds = array<i64: 2, 32, 64>}, {pipeline_mode = #tpu.pipeline_mode<synchronous>, transform_indices = @transform_6, window_bounds = array<i64: 2, 64, 32>}, {pipeline_mode = #tpu.pipeline_mode<synchronous>, transform_indices = @transform_7, window_bounds = array<i64: 32, 128>}, {pipeline_mode = #tpu.pipeline_mode<synchronous>, transform_indices = @transform_8, window_bounds = array<i64: 32, 32>}, {pipeline_mode = #tpu.pipeline_mode<synchronous>, transform_indices = @transform_9, window_bounds = array<i64: 32, 32>}, {pipeline_mode = #tpu.pipeline_mode<synchronous>, transform_indices = @transform_10, window_bounds = array<i64: 32, 128>}, {pipeline_mode = #tpu.pipeline_mode<synchronous>, transform_indices = @transform_11, window_bounds = array<i64: 24, 128>}, {transform_indices = @transform_12, window_bounds = array<i64: 1, 8, 128>}, {transform_indices = @transform_13, window_bounds = array<i64: 1, 8, 128>}]} {
    %c0 = arith.constant 0 : index
    %c0_0 = arith.constant 0 : index
    %c0_1 = arith.constant 0 : index
    %0 = vector.load %arg1[%c0, %c0_0, %c0_1] : memref<1x16x192xf32, #tpu.memory_space<vmem>>, vector<1x16x192xf32>
    %1 = vector.shape_cast %0 : vector<1x16x192xf32> to vector<16x192xf32>
    %c0_2 = arith.constant 0 : index
    %c0_3 = arith.constant 0 : index
    %2 = vector.load %arg3[%c0_2, %c0_3] : memref<192x32xf32, #tpu.memory_space<vmem>>, vector<192x32xf32>
    %cst = arith.constant dense<0.000000e+00> : vector<16x32xf32>
    %3 = tpu.matmul %1, %2, %cst {dimension_numbers = #tpu.dot_dimension_numbers<[1], [0], [0], [1], [0, 0, 1, 1], [], []>} : vector<16x192xf32>, vector<192x32xf32>, vector<16x32xf32> -> vector<16x32xf32>
    %c0_4 = arith.constant 0 : index
    %c0_5 = arith.constant 0 : index
    %4 = vector.load %arg2[%c0_4, %c0_5] : memref<16x32xf32, #tpu.memory_space<vmem>>, vector<16x32xf32>
    %5 = arith.addf %3, %4 : vector<16x32xf32>
    %6 = tpu.iota {dimensions = array<i32: 1>} : vector<16x16xi32>
    %c5_i32 = arith.constant 5 : i32
    %7 = vector.broadcast %c5_i32 : i32 to vector<16x16xi32>
    %8 = arith.cmpi sge, %6, %7 : vector<16x16xi32>
    %c8_i32 = arith.constant 8 : i32
    %9 = vector.broadcast %c8_i32 : i32 to vector<16x16xi32>
    %10 = arith.cmpi slt, %6, %9 : vector<16x16xi32>
    %11 = arith.andi %8, %10 : vector<16x16xi1>
    %cst_6 = arith.constant -1.000000e+30 : f32
    %cst_7 = arith.constant 0.000000e+00 : f32
    %12 = vector.broadcast %cst_6 : f32 to vector<16x16xf32>
    %13 = vector.broadcast %cst_7 : f32 to vector<16x16xf32>
    %14 = arith.select %11, %12, %13 : vector<16x16xi1>, vector<16x16xf32>
    %c0_8 = arith.constant 0 : index
    %c0_9 = arith.constant 0 : index
    %15 = vector.load %arg12[%c0_8, %c0_9] : memref<24x128xf32, #tpu.memory_space<vmem>>, vector<1x32xf32>
    %c1 = arith.constant 1 : index
    %c0_10 = arith.constant 0 : index
    %16 = vector.load %arg12[%c1, %c0_10] : memref<24x128xf32, #tpu.memory_space<vmem>>, vector<1x32xf32>
    %cst_11 = arith.constant dense<0.000000e+00> : vector<16xf32>
    %17 = vector.multi_reduction <add>, %5, %cst_11 [1] : vector<16x32xf32> to vector<16xf32>
    %18 = vector.shape_cast %17 : vector<16xf32> to vector<16x1xf32>
    %cst_12 = arith.constant 3.200000e+01 : f32
    %19 = vector.broadcast %cst_12 : f32 to vector<16x1xf32>
    %20 = arith.divf %18, %19 : vector<16x1xf32>
    %21 = arith.mulf %5, %5 : vector<16x32xf32>
    %cst_13 = arith.constant dense<0.000000e+00> : vector<16xf32>
    %22 = vector.multi_reduction <add>, %21, %cst_13 [1] : vector<16x32xf32> to vector<16xf32>
    %23 = vector.shape_cast %22 : vector<16xf32> to vector<16x1xf32>
    %cst_14 = arith.constant 3.200000e+01 : f32
    %24 = vector.broadcast %cst_14 : f32 to vector<16x1xf32>
    %25 = arith.divf %23, %24 : vector<16x1xf32>
    %26 = vector.broadcast %20 : vector<16x1xf32> to vector<16x32xf32>
    %27 = arith.subf %5, %26 : vector<16x32xf32>
    %28 = arith.mulf %20, %20 : vector<16x1xf32>
    %29 = arith.subf %25, %28 : vector<16x1xf32>
    %cst_15 = arith.constant 9.99999996E-13 : f32
    %30 = vector.broadcast %cst_15 : f32 to vector<16x1xf32>
    %31 = arith.addf %29, %30 : vector<16x1xf32>
    %32 = math.rsqrt %31 : vector<16x1xf32>
    %33 = vector.broadcast %32 : vector<16x1xf32> to vector<16x32xf32>
    %34 = arith.mulf %27, %33 : vector<16x32xf32>
    %35 = vector.broadcast %15 : vector<1x32xf32> to vector<16x32xf32>
    %36 = arith.mulf %34, %35 : vector<16x32xf32>
    %37 = vector.broadcast %16 : vector<1x32xf32> to vector<16x32xf32>
    %38 = arith.addf %36, %37 : vector<16x32xf32>
    %c0_16 = arith.constant 0 : index
    %c0_17 = arith.constant 0 : index
    %c0_18 = arith.constant 0 : index
    %39 = vector.load %arg4[%c0_16, %c0_17, %c0_18] : memref<2x32x96xf32, #tpu.memory_space<vmem>>, vector<1x32x96xf32>
    %40 = vector.shape_cast %39 : vector<1x32x96xf32> to vector<32x96xf32>
    %cst_19 = arith.constant dense<0.000000e+00> : vector<16x96xf32>
    %41 = tpu.matmul %38, %40, %cst_19 {dimension_numbers = #tpu.dot_dimension_numbers<[1], [0], [0], [1], [0, 0, 1, 1], [], []>} : vector<16x32xf32>, vector<32x96xf32>, vector<16x96xf32> -> vector<16x96xf32>
    %c2 = arith.constant 2 : index
    %c0_20 = arith.constant 0 : index
    %42 = vector.load %arg12[%c2, %c0_20] : memref<24x128xf32, #tpu.memory_space<vmem>>, vector<1x96xf32>
    %43 = vector.broadcast %42 : vector<1x96xf32> to vector<16x96xf32>
    %44 = arith.addf %41, %43 : vector<16x96xf32>
    %45 = vector.extract_strided_slice %44 {offsets = [0, 0], sizes = [16, 16], strides = [1, 1]} : vector<16x96xf32> to vector<16x16xf32>
    %46 = vector.extract_strided_slice %44 {offsets = [0, 32], sizes = [16, 16], strides = [1, 1]} : vector<16x96xf32> to vector<16x16xf32>
    %47 = vector.extract_strided_slice %44 {offsets = [0, 64], sizes = [16, 16], strides = [1, 1]} : vector<16x96xf32> to vector<16x16xf32>
    %cst_21 = arith.constant dense<0.000000e+00> : vector<16x16xf32>
    %48 = tpu.matmul %45, %46, %cst_21 {dimension_numbers = #tpu.dot_dimension_numbers<[1], [1], [0], [0], [0, 0, 1, 0], [], []>} : vector<16x16xf32>, vector<16x16xf32>, vector<16x16xf32> -> vector<16x16xf32>
    %cst_22 = arith.constant 2.500000e-01 : f32
    %49 = vector.broadcast %cst_22 : f32 to vector<16x16xf32>
    %50 = arith.mulf %48, %49 : vector<16x16xf32>
    %51 = arith.addf %50, %14 : vector<16x16xf32>
    %cst_23 = arith.constant dense<0xFF800000> : vector<16xf32>
    %52 = vector.multi_reduction <maximumf>, %51, %cst_23 [1] : vector<16x16xf32> to vector<16xf32>
    %53 = vector.shape_cast %52 : vector<16xf32> to vector<16x1xf32>
    %54 = vector.broadcast %53 : vector<16x1xf32> to vector<16x16xf32>
    %55 = arith.subf %51, %54 : vector<16x16xf32>
    %56 = math.exp %55 : vector<16x16xf32>
    %cst_24 = arith.constant dense<0.000000e+00> : vector<16xf32>
    %57 = vector.multi_reduction <add>, %56, %cst_24 [1] : vector<16x16xf32> to vector<16xf32>
    %58 = vector.shape_cast %57 : vector<16xf32> to vector<16x1xf32>
    %59 = vector.broadcast %58 : vector<16x1xf32> to vector<16x16xf32>
    %60 = arith.divf %56, %59 : vector<16x16xf32>
    %cst_25 = arith.constant dense<0.000000e+00> : vector<16x16xf32>
    %61 = tpu.matmul %60, %47, %cst_25 {dimension_numbers = #tpu.dot_dimension_numbers<[1], [0], [0], [1], [0, 0, 1, 1], [], []>} : vector<16x16xf32>, vector<16x16xf32>, vector<16x16xf32> -> vector<16x16xf32>
    %62 = vector.extract_strided_slice %44 {offsets = [0, 16], sizes = [16, 16], strides = [1, 1]} : vector<16x96xf32> to vector<16x16xf32>
    %63 = vector.extract_strided_slice %44 {offsets = [0, 48], sizes = [16, 16], strides = [1, 1]} : vector<16x96xf32> to vector<16x16xf32>
    %64 = vector.extract_strided_slice %44 {offsets = [0, 80], sizes = [16, 16], strides = [1, 1]} : vector<16x96xf32> to vector<16x16xf32>
    %cst_26 = arith.constant dense<0.000000e+00> : vector<16x16xf32>
    %65 = tpu.matmul %62, %63, %cst_26 {dimension_numbers = #tpu.dot_dimension_numbers<[1], [1], [0], [0], [0, 0, 1, 0], [], []>} : vector<16x16xf32>, vector<16x16xf32>, vector<16x16xf32> -> vector<16x16xf32>
    %cst_27 = arith.constant 2.500000e-01 : f32
    %66 = vector.broadcast %cst_27 : f32 to vector<16x16xf32>
    %67 = arith.mulf %65, %66 : vector<16x16xf32>
    %68 = arith.addf %67, %14 : vector<16x16xf32>
    %cst_28 = arith.constant dense<0xFF800000> : vector<16xf32>
    %69 = vector.multi_reduction <maximumf>, %68, %cst_28 [1] : vector<16x16xf32> to vector<16xf32>
    %70 = vector.shape_cast %69 : vector<16xf32> to vector<16x1xf32>
    %71 = vector.broadcast %70 : vector<16x1xf32> to vector<16x16xf32>
    %72 = arith.subf %68, %71 : vector<16x16xf32>
    %73 = math.exp %72 : vector<16x16xf32>
    %cst_29 = arith.constant dense<0.000000e+00> : vector<16xf32>
    %74 = vector.multi_reduction <add>, %73, %cst_29 [1] : vector<16x16xf32> to vector<16xf32>
    %75 = vector.shape_cast %74 : vector<16xf32> to vector<16x1xf32>
    %76 = vector.broadcast %75 : vector<16x1xf32> to vector<16x16xf32>
    %77 = arith.divf %73, %76 : vector<16x16xf32>
    %cst_30 = arith.constant dense<0.000000e+00> : vector<16x16xf32>
    %78 = tpu.matmul %77, %64, %cst_30 {dimension_numbers = #tpu.dot_dimension_numbers<[1], [0], [0], [1], [0, 0, 1, 1], [], []>} : vector<16x16xf32>, vector<16x16xf32>, vector<16x16xf32> -> vector<16x16xf32>
    %79 = tpu.concatenate %61, %78 in 1 : vector<16x16xf32>, vector<16x16xf32> -> vector<16x32xf32>
    %c0_31 = arith.constant 0 : index
    %c0_32 = arith.constant 0 : index
    %c0_33 = arith.constant 0 : index
    %80 = vector.load %arg5[%c0_31, %c0_32, %c0_33] : memref<2x32x32xf32, #tpu.memory_space<vmem>>, vector<1x32x32xf32>
    %81 = vector.shape_cast %80 : vector<1x32x32xf32> to vector<32x32xf32>
    %cst_34 = arith.constant dense<0.000000e+00> : vector<16x32xf32>
    %82 = tpu.matmul %79, %81, %cst_34 {dimension_numbers = #tpu.dot_dimension_numbers<[1], [0], [0], [1], [0, 0, 1, 1], [], []>} : vector<16x32xf32>, vector<32x32xf32>, vector<16x32xf32> -> vector<16x32xf32>
    %83 = arith.addf %5, %82 : vector<16x32xf32>
    %c3 = arith.constant 3 : index
    %c0_35 = arith.constant 0 : index
    %84 = vector.load %arg12[%c3, %c0_35] : memref<24x128xf32, #tpu.memory_space<vmem>>, vector<1x32xf32>
    %85 = vector.broadcast %84 : vector<1x32xf32> to vector<16x32xf32>
    %86 = arith.addf %83, %85 : vector<16x32xf32>
    %c4 = arith.constant 4 : index
    %c0_36 = arith.constant 0 : index
    %87 = vector.load %arg12[%c4, %c0_36] : memref<24x128xf32, #tpu.memory_space<vmem>>, vector<1x32xf32>
    %c5 = arith.constant 5 : index
    %c0_37 = arith.constant 0 : index
    %88 = vector.load %arg12[%c5, %c0_37] : memref<24x128xf32, #tpu.memory_space<vmem>>, vector<1x32xf32>
    %cst_38 = arith.constant dense<0.000000e+00> : vector<16xf32>
    %89 = vector.multi_reduction <add>, %86, %cst_38 [1] : vector<16x32xf32> to vector<16xf32>
    %90 = vector.shape_cast %89 : vector<16xf32> to vector<16x1xf32>
    %cst_39 = arith.constant 3.200000e+01 : f32
    %91 = vector.broadcast %cst_39 : f32 to vector<16x1xf32>
    %92 = arith.divf %90, %91 : vector<16x1xf32>
    %93 = arith.mulf %86, %86 : vector<16x32xf32>
    %cst_40 = arith.constant dense<0.000000e+00> : vector<16xf32>
    %94 = vector.multi_reduction <add>, %93, %cst_40 [1] : vector<16x32xf32> to vector<16xf32>
    %95 = vector.shape_cast %94 : vector<16xf32> to vector<16x1xf32>
    %cst_41 = arith.constant 3.200000e+01 : f32
    %96 = vector.broadcast %cst_41 : f32 to vector<16x1xf32>
    %97 = arith.divf %95, %96 : vector<16x1xf32>
    %98 = vector.broadcast %92 : vector<16x1xf32> to vector<16x32xf32>
    %99 = arith.subf %86, %98 : vector<16x32xf32>
    %100 = arith.mulf %92, %92 : vector<16x1xf32>
    %101 = arith.subf %97, %100 : vector<16x1xf32>
    %cst_42 = arith.constant 9.99999996E-13 : f32
    %102 = vector.broadcast %cst_42 : f32 to vector<16x1xf32>
    %103 = arith.addf %101, %102 : vector<16x1xf32>
    %104 = math.rsqrt %103 : vector<16x1xf32>
    %105 = vector.broadcast %104 : vector<16x1xf32> to vector<16x32xf32>
    %106 = arith.mulf %99, %105 : vector<16x32xf32>
    %107 = vector.broadcast %87 : vector<1x32xf32> to vector<16x32xf32>
    %108 = arith.mulf %106, %107 : vector<16x32xf32>
    %109 = vector.broadcast %88 : vector<1x32xf32> to vector<16x32xf32>
    %110 = arith.addf %108, %109 : vector<16x32xf32>
    %c0_43 = arith.constant 0 : index
    %c0_44 = arith.constant 0 : index
    %c0_45 = arith.constant 0 : index
    %111 = vector.load %arg6[%c0_43, %c0_44, %c0_45] : memref<2x32x64xf32, #tpu.memory_space<vmem>>, vector<1x32x64xf32>
    %112 = vector.shape_cast %111 : vector<1x32x64xf32> to vector<32x64xf32>
    %cst_46 = arith.constant dense<0.000000e+00> : vector<16x64xf32>
    %113 = tpu.matmul %110, %112, %cst_46 {dimension_numbers = #tpu.dot_dimension_numbers<[1], [0], [0], [1], [0, 0, 1, 1], [], []>} : vector<16x32xf32>, vector<32x64xf32>, vector<16x64xf32> -> vector<16x64xf32>
    %c6 = arith.constant 6 : index
    %c0_47 = arith.constant 0 : index
    %114 = vector.load %arg12[%c6, %c0_47] : memref<24x128xf32, #tpu.memory_space<vmem>>, vector<1x64xf32>
    %115 = vector.broadcast %114 : vector<1x64xf32> to vector<16x64xf32>
    %116 = arith.addf %113, %115 : vector<16x64xf32>
    %117 = arith.mulf %116, %116 : vector<16x64xf32>
    %118 = arith.mulf %116, %117 : vector<16x64xf32>
    %cst_48 = arith.constant 4.471500e-02 : f32
    %119 = vector.broadcast %cst_48 : f32 to vector<16x64xf32>
    %120 = arith.mulf %119, %118 : vector<16x64xf32>
    %121 = arith.addf %116, %120 : vector<16x64xf32>
    %cst_49 = arith.constant 0.797884583 : f32
    %122 = vector.broadcast %cst_49 : f32 to vector<16x64xf32>
    %123 = arith.mulf %122, %121 : vector<16x64xf32>
    %124 = math.tanh %123 : vector<16x64xf32>
    %cst_50 = arith.constant 1.000000e+00 : f32
    %125 = vector.broadcast %cst_50 : f32 to vector<16x64xf32>
    %126 = arith.addf %125, %124 : vector<16x64xf32>
    %cst_51 = arith.constant 5.000000e-01 : f32
    %127 = vector.broadcast %cst_51 : f32 to vector<16x64xf32>
    %128 = arith.mulf %127, %126 : vector<16x64xf32>
    %129 = arith.mulf %116, %128 : vector<16x64xf32>
    %c0_52 = arith.constant 0 : index
    %c0_53 = arith.constant 0 : index
    %c0_54 = arith.constant 0 : index
    %130 = vector.load %arg7[%c0_52, %c0_53, %c0_54] : memref<2x64x32xf32, #tpu.memory_space<vmem>>, vector<1x64x32xf32>
    %131 = vector.shape_cast %130 : vector<1x64x32xf32> to vector<64x32xf32>
    %cst_55 = arith.constant dense<0.000000e+00> : vector<16x32xf32>
    %132 = tpu.matmul %129, %131, %cst_55 {dimension_numbers = #tpu.dot_dimension_numbers<[1], [0], [0], [1], [0, 0, 1, 1], [], []>} : vector<16x64xf32>, vector<64x32xf32>, vector<16x32xf32> -> vector<16x32xf32>
    %133 = arith.addf %86, %132 : vector<16x32xf32>
    %c7 = arith.constant 7 : index
    %c0_56 = arith.constant 0 : index
    %134 = vector.load %arg12[%c7, %c0_56] : memref<24x128xf32, #tpu.memory_space<vmem>>, vector<1x32xf32>
    %135 = vector.broadcast %134 : vector<1x32xf32> to vector<16x32xf32>
    %136 = arith.addf %133, %135 : vector<16x32xf32>
    %c8 = arith.constant 8 : index
    %c0_57 = arith.constant 0 : index
    %137 = vector.load %arg12[%c8, %c0_57] : memref<24x128xf32, #tpu.memory_space<vmem>>, vector<1x32xf32>
    %c9 = arith.constant 9 : index
    %c0_58 = arith.constant 0 : index
    %138 = vector.load %arg12[%c9, %c0_58] : memref<24x128xf32, #tpu.memory_space<vmem>>, vector<1x32xf32>
    %cst_59 = arith.constant dense<0.000000e+00> : vector<16xf32>
    %139 = vector.multi_reduction <add>, %136, %cst_59 [1] : vector<16x32xf32> to vector<16xf32>
    %140 = vector.shape_cast %139 : vector<16xf32> to vector<16x1xf32>
    %cst_60 = arith.constant 3.200000e+01 : f32
    %141 = vector.broadcast %cst_60 : f32 to vector<16x1xf32>
    %142 = arith.divf %140, %141 : vector<16x1xf32>
    %143 = arith.mulf %136, %136 : vector<16x32xf32>
    %cst_61 = arith.constant dense<0.000000e+00> : vector<16xf32>
    %144 = vector.multi_reduction <add>, %143, %cst_61 [1] : vector<16x32xf32> to vector<16xf32>
    %145 = vector.shape_cast %144 : vector<16xf32> to vector<16x1xf32>
    %cst_62 = arith.constant 3.200000e+01 : f32
    %146 = vector.broadcast %cst_62 : f32 to vector<16x1xf32>
    %147 = arith.divf %145, %146 : vector<16x1xf32>
    %148 = vector.broadcast %142 : vector<16x1xf32> to vector<16x32xf32>
    %149 = arith.subf %136, %148 : vector<16x32xf32>
    %150 = arith.mulf %142, %142 : vector<16x1xf32>
    %151 = arith.subf %147, %150 : vector<16x1xf32>
    %cst_63 = arith.constant 9.99999996E-13 : f32
    %152 = vector.broadcast %cst_63 : f32 to vector<16x1xf32>
    %153 = arith.addf %151, %152 : vector<16x1xf32>
    %154 = math.rsqrt %153 : vector<16x1xf32>
    %155 = vector.broadcast %154 : vector<16x1xf32> to vector<16x32xf32>
    %156 = arith.mulf %149, %155 : vector<16x32xf32>
    %157 = vector.broadcast %137 : vector<1x32xf32> to vector<16x32xf32>
    %158 = arith.mulf %156, %157 : vector<16x32xf32>
    %159 = vector.broadcast %138 : vector<1x32xf32> to vector<16x32xf32>
    %160 = arith.addf %158, %159 : vector<16x32xf32>
    %c1_64 = arith.constant 1 : index
    %c0_65 = arith.constant 0 : index
    %c0_66 = arith.constant 0 : index
    %161 = vector.load %arg4[%c1_64, %c0_65, %c0_66] : memref<2x32x96xf32, #tpu.memory_space<vmem>>, vector<1x32x96xf32>
    %162 = vector.shape_cast %161 : vector<1x32x96xf32> to vector<32x96xf32>
    %cst_67 = arith.constant dense<0.000000e+00> : vector<16x96xf32>
    %163 = tpu.matmul %160, %162, %cst_67 {dimension_numbers = #tpu.dot_dimension_numbers<[1], [0], [0], [1], [0, 0, 1, 1], [], []>} : vector<16x32xf32>, vector<32x96xf32>, vector<16x96xf32> -> vector<16x96xf32>
    %c10 = arith.constant 10 : index
    %c0_68 = arith.constant 0 : index
    %164 = vector.load %arg12[%c10, %c0_68] : memref<24x128xf32, #tpu.memory_space<vmem>>, vector<1x96xf32>
    %165 = vector.broadcast %164 : vector<1x96xf32> to vector<16x96xf32>
    %166 = arith.addf %163, %165 : vector<16x96xf32>
    %167 = vector.extract_strided_slice %166 {offsets = [0, 0], sizes = [16, 16], strides = [1, 1]} : vector<16x96xf32> to vector<16x16xf32>
    %168 = vector.extract_strided_slice %166 {offsets = [0, 32], sizes = [16, 16], strides = [1, 1]} : vector<16x96xf32> to vector<16x16xf32>
    %169 = vector.extract_strided_slice %166 {offsets = [0, 64], sizes = [16, 16], strides = [1, 1]} : vector<16x96xf32> to vector<16x16xf32>
    %cst_69 = arith.constant dense<0.000000e+00> : vector<16x16xf32>
    %170 = tpu.matmul %167, %168, %cst_69 {dimension_numbers = #tpu.dot_dimension_numbers<[1], [1], [0], [0], [0, 0, 1, 0], [], []>} : vector<16x16xf32>, vector<16x16xf32>, vector<16x16xf32> -> vector<16x16xf32>
    %cst_70 = arith.constant 2.500000e-01 : f32
    %171 = vector.broadcast %cst_70 : f32 to vector<16x16xf32>
    %172 = arith.mulf %170, %171 : vector<16x16xf32>
    %173 = arith.addf %172, %14 : vector<16x16xf32>
    %cst_71 = arith.constant dense<0xFF800000> : vector<16xf32>
    %174 = vector.multi_reduction <maximumf>, %173, %cst_71 [1] : vector<16x16xf32> to vector<16xf32>
    %175 = vector.shape_cast %174 : vector<16xf32> to vector<16x1xf32>
    %176 = vector.broadcast %175 : vector<16x1xf32> to vector<16x16xf32>
    %177 = arith.subf %173, %176 : vector<16x16xf32>
    %178 = math.exp %177 : vector<16x16xf32>
    %cst_72 = arith.constant dense<0.000000e+00> : vector<16xf32>
    %179 = vector.multi_reduction <add>, %178, %cst_72 [1] : vector<16x16xf32> to vector<16xf32>
    %180 = vector.shape_cast %179 : vector<16xf32> to vector<16x1xf32>
    %181 = vector.broadcast %180 : vector<16x1xf32> to vector<16x16xf32>
    %182 = arith.divf %178, %181 : vector<16x16xf32>
    %cst_73 = arith.constant dense<0.000000e+00> : vector<16x16xf32>
    %183 = tpu.matmul %182, %169, %cst_73 {dimension_numbers = #tpu.dot_dimension_numbers<[1], [0], [0], [1], [0, 0, 1, 1], [], []>} : vector<16x16xf32>, vector<16x16xf32>, vector<16x16xf32> -> vector<16x16xf32>
    %184 = vector.extract_strided_slice %166 {offsets = [0, 16], sizes = [16, 16], strides = [1, 1]} : vector<16x96xf32> to vector<16x16xf32>
    %185 = vector.extract_strided_slice %166 {offsets = [0, 48], sizes = [16, 16], strides = [1, 1]} : vector<16x96xf32> to vector<16x16xf32>
    %186 = vector.extract_strided_slice %166 {offsets = [0, 80], sizes = [16, 16], strides = [1, 1]} : vector<16x96xf32> to vector<16x16xf32>
    %cst_74 = arith.constant dense<0.000000e+00> : vector<16x16xf32>
    %187 = tpu.matmul %184, %185, %cst_74 {dimension_numbers = #tpu.dot_dimension_numbers<[1], [1], [0], [0], [0, 0, 1, 0], [], []>} : vector<16x16xf32>, vector<16x16xf32>, vector<16x16xf32> -> vector<16x16xf32>
    %cst_75 = arith.constant 2.500000e-01 : f32
    %188 = vector.broadcast %cst_75 : f32 to vector<16x16xf32>
    %189 = arith.mulf %187, %188 : vector<16x16xf32>
    %190 = arith.addf %189, %14 : vector<16x16xf32>
    %cst_76 = arith.constant dense<0xFF800000> : vector<16xf32>
    %191 = vector.multi_reduction <maximumf>, %190, %cst_76 [1] : vector<16x16xf32> to vector<16xf32>
    %192 = vector.shape_cast %191 : vector<16xf32> to vector<16x1xf32>
    %193 = vector.broadcast %192 : vector<16x1xf32> to vector<16x16xf32>
    %194 = arith.subf %190, %193 : vector<16x16xf32>
    %195 = math.exp %194 : vector<16x16xf32>
    %cst_77 = arith.constant dense<0.000000e+00> : vector<16xf32>
    %196 = vector.multi_reduction <add>, %195, %cst_77 [1] : vector<16x16xf32> to vector<16xf32>
    %197 = vector.shape_cast %196 : vector<16xf32> to vector<16x1xf32>
    %198 = vector.broadcast %197 : vector<16x1xf32> to vector<16x16xf32>
    %199 = arith.divf %195, %198 : vector<16x16xf32>
    %cst_78 = arith.constant dense<0.000000e+00> : vector<16x16xf32>
    %200 = tpu.matmul %199, %186, %cst_78 {dimension_numbers = #tpu.dot_dimension_numbers<[1], [0], [0], [1], [0, 0, 1, 1], [], []>} : vector<16x16xf32>, vector<16x16xf32>, vector<16x16xf32> -> vector<16x16xf32>
    %201 = tpu.concatenate %183, %200 in 1 : vector<16x16xf32>, vector<16x16xf32> -> vector<16x32xf32>
    %c1_79 = arith.constant 1 : index
    %c0_80 = arith.constant 0 : index
    %c0_81 = arith.constant 0 : index
    %202 = vector.load %arg5[%c1_79, %c0_80, %c0_81] : memref<2x32x32xf32, #tpu.memory_space<vmem>>, vector<1x32x32xf32>
    %203 = vector.shape_cast %202 : vector<1x32x32xf32> to vector<32x32xf32>
    %cst_82 = arith.constant dense<0.000000e+00> : vector<16x32xf32>
    %204 = tpu.matmul %201, %203, %cst_82 {dimension_numbers = #tpu.dot_dimension_numbers<[1], [0], [0], [1], [0, 0, 1, 1], [], []>} : vector<16x32xf32>, vector<32x32xf32>, vector<16x32xf32> -> vector<16x32xf32>
    %205 = arith.addf %136, %204 : vector<16x32xf32>
    %c11 = arith.constant 11 : index
    %c0_83 = arith.constant 0 : index
    %206 = vector.load %arg12[%c11, %c0_83] : memref<24x128xf32, #tpu.memory_space<vmem>>, vector<1x32xf32>
    %207 = vector.broadcast %206 : vector<1x32xf32> to vector<16x32xf32>
    %208 = arith.addf %205, %207 : vector<16x32xf32>
    %c12 = arith.constant 12 : index
    %c0_84 = arith.constant 0 : index
    %209 = vector.load %arg12[%c12, %c0_84] : memref<24x128xf32, #tpu.memory_space<vmem>>, vector<1x32xf32>
    %c13 = arith.constant 13 : index
    %c0_85 = arith.constant 0 : index
    %210 = vector.load %arg12[%c13, %c0_85] : memref<24x128xf32, #tpu.memory_space<vmem>>, vector<1x32xf32>
    %cst_86 = arith.constant dense<0.000000e+00> : vector<16xf32>
    %211 = vector.multi_reduction <add>, %208, %cst_86 [1] : vector<16x32xf32> to vector<16xf32>
    %212 = vector.shape_cast %211 : vector<16xf32> to vector<16x1xf32>
    %cst_87 = arith.constant 3.200000e+01 : f32
    %213 = vector.broadcast %cst_87 : f32 to vector<16x1xf32>
    %214 = arith.divf %212, %213 : vector<16x1xf32>
    %215 = arith.mulf %208, %208 : vector<16x32xf32>
    %cst_88 = arith.constant dense<0.000000e+00> : vector<16xf32>
    %216 = vector.multi_reduction <add>, %215, %cst_88 [1] : vector<16x32xf32> to vector<16xf32>
    %217 = vector.shape_cast %216 : vector<16xf32> to vector<16x1xf32>
    %cst_89 = arith.constant 3.200000e+01 : f32
    %218 = vector.broadcast %cst_89 : f32 to vector<16x1xf32>
    %219 = arith.divf %217, %218 : vector<16x1xf32>
    %220 = vector.broadcast %214 : vector<16x1xf32> to vector<16x32xf32>
    %221 = arith.subf %208, %220 : vector<16x32xf32>
    %222 = arith.mulf %214, %214 : vector<16x1xf32>
    %223 = arith.subf %219, %222 : vector<16x1xf32>
    %cst_90 = arith.constant 9.99999996E-13 : f32
    %224 = vector.broadcast %cst_90 : f32 to vector<16x1xf32>
    %225 = arith.addf %223, %224 : vector<16x1xf32>
    %226 = math.rsqrt %225 : vector<16x1xf32>
    %227 = vector.broadcast %226 : vector<16x1xf32> to vector<16x32xf32>
    %228 = arith.mulf %221, %227 : vector<16x32xf32>
    %229 = vector.broadcast %209 : vector<1x32xf32> to vector<16x32xf32>
    %230 = arith.mulf %228, %229 : vector<16x32xf32>
    %231 = vector.broadcast %210 : vector<1x32xf32> to vector<16x32xf32>
    %232 = arith.addf %230, %231 : vector<16x32xf32>
    %c1_91 = arith.constant 1 : index
    %c0_92 = arith.constant 0 : index
    %c0_93 = arith.constant 0 : index
    %233 = vector.load %arg6[%c1_91, %c0_92, %c0_93] : memref<2x32x64xf32, #tpu.memory_space<vmem>>, vector<1x32x64xf32>
    %234 = vector.shape_cast %233 : vector<1x32x64xf32> to vector<32x64xf32>
    %cst_94 = arith.constant dense<0.000000e+00> : vector<16x64xf32>
    %235 = tpu.matmul %232, %234, %cst_94 {dimension_numbers = #tpu.dot_dimension_numbers<[1], [0], [0], [1], [0, 0, 1, 1], [], []>} : vector<16x32xf32>, vector<32x64xf32>, vector<16x64xf32> -> vector<16x64xf32>
    %c14 = arith.constant 14 : index
    %c0_95 = arith.constant 0 : index
    %236 = vector.load %arg12[%c14, %c0_95] : memref<24x128xf32, #tpu.memory_space<vmem>>, vector<1x64xf32>
    %237 = vector.broadcast %236 : vector<1x64xf32> to vector<16x64xf32>
    %238 = arith.addf %235, %237 : vector<16x64xf32>
    %239 = arith.mulf %238, %238 : vector<16x64xf32>
    %240 = arith.mulf %238, %239 : vector<16x64xf32>
    %cst_96 = arith.constant 4.471500e-02 : f32
    %241 = vector.broadcast %cst_96 : f32 to vector<16x64xf32>
    %242 = arith.mulf %241, %240 : vector<16x64xf32>
    %243 = arith.addf %238, %242 : vector<16x64xf32>
    %cst_97 = arith.constant 0.797884583 : f32
    %244 = vector.broadcast %cst_97 : f32 to vector<16x64xf32>
    %245 = arith.mulf %244, %243 : vector<16x64xf32>
    %246 = math.tanh %245 : vector<16x64xf32>
    %cst_98 = arith.constant 1.000000e+00 : f32
    %247 = vector.broadcast %cst_98 : f32 to vector<16x64xf32>
    %248 = arith.addf %247, %246 : vector<16x64xf32>
    %cst_99 = arith.constant 5.000000e-01 : f32
    %249 = vector.broadcast %cst_99 : f32 to vector<16x64xf32>
    %250 = arith.mulf %249, %248 : vector<16x64xf32>
    %251 = arith.mulf %238, %250 : vector<16x64xf32>
    %c1_100 = arith.constant 1 : index
    %c0_101 = arith.constant 0 : index
    %c0_102 = arith.constant 0 : index
    %252 = vector.load %arg7[%c1_100, %c0_101, %c0_102] : memref<2x64x32xf32, #tpu.memory_space<vmem>>, vector<1x64x32xf32>
    %253 = vector.shape_cast %252 : vector<1x64x32xf32> to vector<64x32xf32>
    %cst_103 = arith.constant dense<0.000000e+00> : vector<16x32xf32>
    %254 = tpu.matmul %251, %253, %cst_103 {dimension_numbers = #tpu.dot_dimension_numbers<[1], [0], [0], [1], [0, 0, 1, 1], [], []>} : vector<16x64xf32>, vector<64x32xf32>, vector<16x32xf32> -> vector<16x32xf32>
    %255 = arith.addf %208, %254 : vector<16x32xf32>
    %c15 = arith.constant 15 : index
    %c0_104 = arith.constant 0 : index
    %256 = vector.load %arg12[%c15, %c0_104] : memref<24x128xf32, #tpu.memory_space<vmem>>, vector<1x32xf32>
    %257 = vector.broadcast %256 : vector<1x32xf32> to vector<16x32xf32>
    %258 = arith.addf %255, %257 : vector<16x32xf32>
    %c16 = arith.constant 16 : index
    %c0_105 = arith.constant 0 : index
    %259 = vector.load %arg12[%c16, %c0_105] : memref<24x128xf32, #tpu.memory_space<vmem>>, vector<1x32xf32>
    %c17 = arith.constant 17 : index
    %c0_106 = arith.constant 0 : index
    %260 = vector.load %arg12[%c17, %c0_106] : memref<24x128xf32, #tpu.memory_space<vmem>>, vector<1x32xf32>
    %cst_107 = arith.constant dense<0.000000e+00> : vector<16xf32>
    %261 = vector.multi_reduction <add>, %258, %cst_107 [1] : vector<16x32xf32> to vector<16xf32>
    %262 = vector.shape_cast %261 : vector<16xf32> to vector<16x1xf32>
    %cst_108 = arith.constant 3.200000e+01 : f32
    %263 = vector.broadcast %cst_108 : f32 to vector<16x1xf32>
    %264 = arith.divf %262, %263 : vector<16x1xf32>
    %265 = arith.mulf %258, %258 : vector<16x32xf32>
    %cst_109 = arith.constant dense<0.000000e+00> : vector<16xf32>
    %266 = vector.multi_reduction <add>, %265, %cst_109 [1] : vector<16x32xf32> to vector<16xf32>
    %267 = vector.shape_cast %266 : vector<16xf32> to vector<16x1xf32>
    %cst_110 = arith.constant 3.200000e+01 : f32
    %268 = vector.broadcast %cst_110 : f32 to vector<16x1xf32>
    %269 = arith.divf %267, %268 : vector<16x1xf32>
    %270 = vector.broadcast %264 : vector<16x1xf32> to vector<16x32xf32>
    %271 = arith.subf %258, %270 : vector<16x32xf32>
    %272 = arith.mulf %264, %264 : vector<16x1xf32>
    %273 = arith.subf %269, %272 : vector<16x1xf32>
    %cst_111 = arith.constant 9.99999996E-13 : f32
    %274 = vector.broadcast %cst_111 : f32 to vector<16x1xf32>
    %275 = arith.addf %273, %274 : vector<16x1xf32>
    %276 = math.rsqrt %275 : vector<16x1xf32>
    %277 = vector.broadcast %276 : vector<16x1xf32> to vector<16x32xf32>
    %278 = arith.mulf %271, %277 : vector<16x32xf32>
    %279 = vector.broadcast %259 : vector<1x32xf32> to vector<16x32xf32>
    %280 = arith.mulf %278, %279 : vector<16x32xf32>
    %281 = vector.broadcast %260 : vector<1x32xf32> to vector<16x32xf32>
    %282 = arith.addf %280, %281 : vector<16x32xf32>
    %283 = vector.extract_strided_slice %282 {offsets = [8, 0], sizes = [8, 32], strides = [1, 1]} : vector<16x32xf32> to vector<8x32xf32>
    %c0_112 = arith.constant 0 : index
    %c0_113 = arith.constant 0 : index
    %284 = vector.load %arg8[%c0_112, %c0_113] : memref<32x128xf32, #tpu.memory_space<vmem>>, vector<32x128xf32>
    %cst_114 = arith.constant dense<0.000000e+00> : vector<8x128xf32>
    %285 = tpu.matmul %283, %284, %cst_114 {dimension_numbers = #tpu.dot_dimension_numbers<[1], [0], [0], [1], [0, 0, 1, 1], [], []>} : vector<8x32xf32>, vector<32x128xf32>, vector<8x128xf32> -> vector<8x128xf32>
    %c18 = arith.constant 18 : index
    %c0_115 = arith.constant 0 : index
    %286 = vector.load %arg12[%c18, %c0_115] : memref<24x128xf32, #tpu.memory_space<vmem>>, vector<1x128xf32>
    %287 = vector.broadcast %286 : vector<1x128xf32> to vector<8x128xf32>
    %288 = arith.addf %285, %287 : vector<8x128xf32>
    %c0_116 = arith.constant 0 : index
    %c0_117 = arith.constant 0 : index
    %c0_118 = arith.constant 0 : index
    %289 = vector.load %arg13[%c0_116, %c0_117, %c0_118] : memref<1x8x128xf32, #tpu.memory_space<vmem>>, vector<1x8x128xf32>
    %290 = vector.shape_cast %289 : vector<1x8x128xf32> to vector<8x128xf32>
    %291 = vector.shape_cast %288 : vector<8x128xf32> to vector<1x8x128xf32>
    tpu.vector_store %arg13[%c0_116, %c0_117, %c0_118], %291 {strides = array<i32>} : memref<1x8x128xf32, #tpu.memory_space<vmem>>, vector<1x8x128xf32>,
    %c0_119 = arith.constant 0 : index
    %c0_120 = arith.constant 0 : index
    %292 = vector.load %arg9[%c0_119, %c0_120] : memref<32x32xf32, #tpu.memory_space<vmem>>, vector<32x32xf32>
    %cst_121 = arith.constant dense<0.000000e+00> : vector<8x32xf32>
    %293 = tpu.matmul %283, %292, %cst_121 {dimension_numbers = #tpu.dot_dimension_numbers<[1], [0], [0], [1], [0, 0, 1, 1], [], []>} : vector<8x32xf32>, vector<32x32xf32>, vector<8x32xf32> -> vector<8x32xf32>
    %c19 = arith.constant 19 : index
    %c0_122 = arith.constant 0 : index
    %294 = vector.load %arg12[%c19, %c0_122] : memref<24x128xf32, #tpu.memory_space<vmem>>, vector<1x32xf32>
    %295 = vector.broadcast %294 : vector<1x32xf32> to vector<8x32xf32>
    %296 = arith.addf %293, %295 : vector<8x32xf32>
    %cst_123 = arith.constant 0.000000e+00 : f32
    %297 = vector.broadcast %cst_123 : f32 to vector<8x32xf32>
    %298 = arith.maximumf %296, %297 : vector<8x32xf32>
    %c0_124 = arith.constant 0 : index
    %c0_125 = arith.constant 0 : index
    %299 = vector.load %arg10[%c0_124, %c0_125] : memref<32x32xf32, #tpu.memory_space<vmem>>, vector<32x32xf32>
    %cst_126 = arith.constant dense<0.000000e+00> : vector<8x32xf32>
    %300 = tpu.matmul %298, %299, %cst_126 {dimension_numbers = #tpu.dot_dimension_numbers<[1], [0], [0], [1], [0, 0, 1, 1], [], []>} : vector<8x32xf32>, vector<32x32xf32>, vector<8x32xf32> -> vector<8x32xf32>
    %c20 = arith.constant 20 : index
    %c0_127 = arith.constant 0 : index
    %301 = vector.load %arg12[%c20, %c0_127] : memref<24x128xf32, #tpu.memory_space<vmem>>, vector<1x32xf32>
    %302 = vector.broadcast %301 : vector<1x32xf32> to vector<8x32xf32>
    %303 = arith.addf %300, %302 : vector<8x32xf32>
    %cst_128 = arith.constant 0.000000e+00 : f32
    %304 = vector.broadcast %cst_128 : f32 to vector<8x32xf32>
    %305 = arith.maximumf %303, %304 : vector<8x32xf32>
    %c0_129 = arith.constant 0 : index
    %c0_130 = arith.constant 0 : index
    %306 = vector.load %arg11[%c0_129, %c0_130] : memref<32x128xf32, #tpu.memory_space<vmem>>, vector<32x128xf32>
    %cst_131 = arith.constant dense<0.000000e+00> : vector<8x128xf32>
    %307 = tpu.matmul %305, %306, %cst_131 {dimension_numbers = #tpu.dot_dimension_numbers<[1], [0], [0], [1], [0, 0, 1, 1], [], []>} : vector<8x32xf32>, vector<32x128xf32>, vector<8x128xf32> -> vector<8x128xf32>
    %c21 = arith.constant 21 : index
    %c0_132 = arith.constant 0 : index
    %308 = vector.load %arg12[%c21, %c0_132] : memref<24x128xf32, #tpu.memory_space<vmem>>, vector<1x128xf32>
    %309 = vector.broadcast %308 : vector<1x128xf32> to vector<8x128xf32>
    %310 = arith.addf %307, %309 : vector<8x128xf32>
    %311 = arith.negf %310 : vector<8x128xf32>
    %312 = math.exp %311 : vector<8x128xf32>
    %cst_133 = arith.constant 1.000000e+00 : f32
    %313 = vector.broadcast %cst_133 : f32 to vector<8x128xf32>
    %314 = arith.addf %313, %312 : vector<8x128xf32>
    %315 = arith.divf %313, %314 : vector<8x128xf32>
    %c0_134 = arith.constant 0 : index
    %c0_135 = arith.constant 0 : index
    %c0_136 = arith.constant 0 : index
    %316 = vector.load %arg14[%c0_134, %c0_135, %c0_136] : memref<1x8x128xf32, #tpu.memory_space<vmem>>, vector<1x8x128xf32>
    %317 = vector.shape_cast %316 : vector<1x8x128xf32> to vector<8x128xf32>
    %318 = vector.shape_cast %315 : vector<8x128xf32> to vector<1x8x128xf32>
    tpu.vector_store %arg14[%c0_134, %c0_135, %c0_136], %318 {strides = array<i32>} : memref<1x8x128xf32, #tpu.memory_space<vmem>>, vector<1x8x128xf32>,
    return
  }
  func.func @transform_0(%arg0: i32) -> (i32, i32, i32) {
    %c0_i32 = arith.constant 0 : i32
    %c0_i32_0 = arith.constant 0 : i32
    %c0_i32_1 = arith.constant 0 : i32
    return %arg0, %c0_i32, %c0_i32_0 : i32, i32, i32
  }
  func.func @transform_1(%arg0: i32) -> (i32, i32) {
    %c0_i32 = arith.constant 0 : i32
    %c0_i32_0 = arith.constant 0 : i32
    %c0_i32_1 = arith.constant 0 : i32
    return %c0_i32, %c0_i32_0 : i32, i32
  }
  func.func @transform_2(%arg0: i32) -> (i32, i32) {
    %c0_i32 = arith.constant 0 : i32
    %c0_i32_0 = arith.constant 0 : i32
    %c0_i32_1 = arith.constant 0 : i32
    return %c0_i32, %c0_i32_0 : i32, i32
  }
  func.func @transform_3(%arg0: i32) -> (i32, i32, i32) {
    %c0_i32 = arith.constant 0 : i32
    %c0_i32_0 = arith.constant 0 : i32
    %c0_i32_1 = arith.constant 0 : i32
    %c0_i32_2 = arith.constant 0 : i32
    return %c0_i32, %c0_i32_0, %c0_i32_1 : i32, i32, i32
  }
  func.func @transform_4(%arg0: i32) -> (i32, i32, i32) {
    %c0_i32 = arith.constant 0 : i32
    %c0_i32_0 = arith.constant 0 : i32
    %c0_i32_1 = arith.constant 0 : i32
    %c0_i32_2 = arith.constant 0 : i32
    return %c0_i32, %c0_i32_0, %c0_i32_1 : i32, i32, i32
  }
  func.func @transform_5(%arg0: i32) -> (i32, i32, i32) {
    %c0_i32 = arith.constant 0 : i32
    %c0_i32_0 = arith.constant 0 : i32
    %c0_i32_1 = arith.constant 0 : i32
    %c0_i32_2 = arith.constant 0 : i32
    return %c0_i32, %c0_i32_0, %c0_i32_1 : i32, i32, i32
  }
  func.func @transform_6(%arg0: i32) -> (i32, i32, i32) {
    %c0_i32 = arith.constant 0 : i32
    %c0_i32_0 = arith.constant 0 : i32
    %c0_i32_1 = arith.constant 0 : i32
    %c0_i32_2 = arith.constant 0 : i32
    return %c0_i32, %c0_i32_0, %c0_i32_1 : i32, i32, i32
  }
  func.func @transform_7(%arg0: i32) -> (i32, i32) {
    %c0_i32 = arith.constant 0 : i32
    %c0_i32_0 = arith.constant 0 : i32
    %c0_i32_1 = arith.constant 0 : i32
    return %c0_i32, %c0_i32_0 : i32, i32
  }
  func.func @transform_8(%arg0: i32) -> (i32, i32) {
    %c0_i32 = arith.constant 0 : i32
    %c0_i32_0 = arith.constant 0 : i32
    %c0_i32_1 = arith.constant 0 : i32
    return %c0_i32, %c0_i32_0 : i32, i32
  }
  func.func @transform_9(%arg0: i32) -> (i32, i32) {
    %c0_i32 = arith.constant 0 : i32
    %c0_i32_0 = arith.constant 0 : i32
    %c0_i32_1 = arith.constant 0 : i32
    return %c0_i32, %c0_i32_0 : i32, i32
  }
  func.func @transform_10(%arg0: i32) -> (i32, i32) {
    %c0_i32 = arith.constant 0 : i32
    %c0_i32_0 = arith.constant 0 : i32
    %c0_i32_1 = arith.constant 0 : i32
    return %c0_i32, %c0_i32_0 : i32, i32
  }
  func.func @transform_11(%arg0: i32) -> (i32, i32) {
    %c0_i32 = arith.constant 0 : i32
    %c0_i32_0 = arith.constant 0 : i32
    %c0_i32_1 = arith.constant 0 : i32
    return %c0_i32, %c0_i32_0 : i32, i32
  }
  func.func @transform_12(%arg0: i32) -> (i32, i32, i32) {
    %c0_i32 = arith.constant 0 : i32
    %c0_i32_0 = arith.constant 0 : i32
    %c0_i32_1 = arith.constant 0 : i32
    return %arg0, %c0_i32, %c0_i32_0 : i32, i32, i32
  }
  func.func @transform_13(%arg0: i32) -> (i32, i32, i32) {
    %c0_i32 = arith.constant 0 : i32
    %c0_i32_0 = arith.constant 0 : i32
    %c0_i32_1 = arith.constant 0 : i32
    return %arg0, %c0_i32, %c0_i32_0 : i32, i32, i32
  }
}

</mosaic_0001>

<llo_original>
// kernel: inferencer_forward.1
$region0: #{inferencer_forward.1}
  #allocation0 [shape = 'u32[]', space=smem, size = 0x4, offset = 0x4, fixed_abs, tag = 'smem constant byte address 0x4 - core index']
  #allocation1 [shape = 'u32[72,128]{1,0:T(1,128)}', space=vmem, size = 0x9000, scoped, tag = 'internal scratch']
  %s0 = inlined_call_operand.vmem [shape: f32[2,16,192], index: 0, kind: input, shape index: {}]
  %s1 = inlined_call_operand.vmem [shape: f32[16,32], index: 1, kind: input, shape index: {}]
  %s2 = inlined_call_operand.vmem [shape: f32[192,32], index: 2, kind: input, shape index: {}]
  %s3 = inlined_call_operand.vmem [shape: f32[2,32,96], index: 3, kind: input, shape index: {}]
  %s4 = inlined_call_operand.vmem [shape: f32[2,32,32], index: 4, kind: input, shape index: {}]
  %s5 = inlined_call_operand.vmem [shape: f32[2,32,64], index: 5, kind: input, shape index: {}]
  %s6 = inlined_call_operand.vmem [shape: f32[2,64,32], index: 6, kind: input, shape index: {}]
  %s7 = inlined_call_operand.vmem [shape: f32[32,128], index: 7, kind: input, shape index: {}]
  %s8 = inlined_call_operand.vmem [shape: f32[32,32], index: 8, kind: input, shape index: {}]
  %s9 = inlined_call_operand.vmem [shape: f32[32,32], index: 9, kind: input, shape index: {}]
  %s10 = inlined_call_operand.vmem [shape: f32[32,128], index: 10, kind: input, shape index: {}]
  %s11 = inlined_call_operand.vmem [shape: f32[24,128], index: 11, kind: input, shape index: {}]
  %s12 = inlined_call_operand.vmem [shape: f32[2,8,128], index: 12, kind: output, shape index: {0}]
  %s13 = inlined_call_operand.vmem [shape: f32[2,8,128], index: 13, kind: output, shape index: {1}]
  %14 = xla_tuple %s12, %s13
  %s15 = sld [smem:[#allocation0]]
  $region89: #{inferencer_forward.1} parent=0
    _
  %s17 = ssub.s32 1, %s15
  %s18 = scalar_select 0, %s17, %s15
  loop: start=0, step=1, limit=4
  $region2: #{inferencer_forward.1} parent=0 // loop_pre_header
    _
  $region3: #{inferencer_forward.1} parent=0 // loop_header
    %s20 = sphi 0, %s24
    %p21 = scmp.ge.s32.totalorder %s20, 4
    %s30 = sphi 0, %s32
    %s33 = sphi 0, %s30
    %s34 = sphi 0, %s33
    %s50 = sphi 0, %s34
    %s54 = sphi 0, %s54
    %s56 = sphi 0, %s54
    %s57 = sphi 0, %s56
    %s71 = sphi 0, %s57
    %s75 = sphi 0, %s75
    %s77 = sphi 0, %s75
    %s78 = sphi 0, %s77
    %s92 = sphi 0, %s78
    %s96 = sphi 0, %s96
    %s98 = sphi 0, %s96
    %s99 = sphi 0, %s98
    %s113 = sphi 0, %s99
    %s117 = sphi 0, %s117
    %s119 = sphi 0, %s117
    %s120 = sphi 0, %s119
    %s134 = sphi 0, %s120
    %s138 = sphi 0, %s138
    %s140 = sphi 0, %s138
    %s141 = sphi 0, %s140
    %s155 = sphi 0, %s141
    %s159 = sphi 0, %s159
    %s161 = sphi 0, %s159
    %s162 = sphi 0, %s161
    %s176 = sphi 0, %s162
    %s180 = sphi 0, %s180
    %s182 = sphi 0, %s180
    %s183 = sphi 0, %s182
    %s197 = sphi 0, %s183
    %s201 = sphi 0, %s201
    %s203 = sphi 0, %s201
    %s204 = sphi 0, %s203
    %s218 = sphi 0, %s204
    %s222 = sphi 0, %s222
    %s224 = sphi 0, %s222
    %s225 = sphi 0, %s224
    %s239 = sphi 0, %s225
    %s243 = sphi 0, %s243
    %s245 = sphi 0, %s243
    %s246 = sphi 0, %s245
    %s260 = sphi 0, %s246
    %s264 = sphi 0, %s264
    %s266 = sphi 0, %s264
    %s267 = sphi 0, %s266
    %s281 = sphi 0, %s267
    %s287 = sphi 0, %s289
    %s290 = sphi 0, %s287
    %s291 = sphi 0, %s290
    %s307 = sphi 0, %s291
    %s313 = sphi 0, %s315
    %s316 = sphi 0, %s313
    %s317 = sphi 0, %s316
    %s333 = sphi 0, %s317
  $region4: #{inferencer_forward.1} parent=0 // loop_header_branch
    %23 = sbr.rel (%p21) target = $region8
  $region5: #{inferencer_forward.1} parent=0 // loop_body
    %s25 = ssub.s32 %s20, 1
    %s26 = ssub.s32 %s20, 2
    %s27 = sadd.s32 %s20, 1
    %s28 = ssub.s32 %s20, %s27
    %p29 = scmp.eq.s32.totalorder %s28, 0
    %s31 = sadd.s32 %s30, 1
    %s32 = scalar_select %p29, %s30, %s31
    %p35 = pneg %p29
    %p36 = scmp.eq.s32.totalorder %s20, 1
    %p37 = por %p35, %p36
    %p38 = scmp.ne.s32.totalorder %s30, %s33
    %p39 = scmp.eq.s32.totalorder %s20, 0
    %p40 = por %p38, %p39
    %p41 = scmp.ne.s32.totalorder %s30, %s33
    %p42 = scmp.eq.s32.totalorder %s25, 1
    %p43 = por %p41, %p42
    %p44 = scmp.ne.s32.totalorder %s33, %s34
    %p45 = scmp.eq.s32.totalorder %s25, 0
    %p46 = por %p44, %p45
    %p47 = scmp.ne.s32.totalorder %s33, %s34
    %p48 = scmp.eq.s32.totalorder %s26, 1
    %p49 = por %p47, %p48
    %p51 = scmp.ne.s32.totalorder %s34, %s50
    %p52 = scmp.eq.s32.totalorder %s26, 0
    %p53 = por %p51, %p52
    %s55 = sadd.s32 %s54, 1
    %p58 = scmp.eq.s32.totalorder %s20, 1
    %p59 = scmp.ne.s32.totalorder %s54, %s56
    %p60 = scmp.eq.s32.totalorder %s20, 0
    %p61 = por %p59, %p60
    %p62 = scmp.ne.s32.totalorder %s54, %s56
    %p63 = scmp.eq.s32.totalorder %s25, 1
    %p64 = por %p62, %p63
    %p65 = scmp.ne.s32.totalorder %s56, %s57
    %p66 = scmp.eq.s32.totalorder %s25, 0
    %p67 = por %p65, %p66
    %p68 = scmp.ne.s32.totalorder %s56, %s57
    %p69 = scmp.eq.s32.totalorder %s26, 1
    %p70 = por %p68, %p69
    %p72 = scmp.ne.s32.totalorder %s57, %s71
    %p73 = scmp.eq.s32.totalorder %s26, 0
    %p74 = por %p72, %p73
    %s76 = sadd.s32 %s75, 1
    %p79 = scmp.eq.s32.totalorder %s20, 1
    %p80 = scmp.ne.s32.totalorder %s75, %s77
    %p81 = scmp.eq.s32.totalorder %s20, 0
    %p82 = por %p80, %p81
    %p83 = scmp.ne.s32.totalorder %s75, %s77
    %p84 = scmp.eq.s32.totalorder %s25, 1
    %p85 = por %p83, %p84
    %p86 = scmp.ne.s32.totalorder %s77, %s78
    %p87 = scmp.eq.s32.totalorder %s25, 0
    %p88 = por %p86, %p87
    %p89 = scmp.ne.s32.totalorder %s77, %s78
    %p90 = scmp.eq.s32.totalorder %s26, 1
    %p91 = por %p89, %p90
    %p93 = scmp.ne.s32.totalorder %s78, %s92
    %p94 = scmp.eq.s32.totalorder %s26, 0
    %p95 = por %p93, %p94
    %s97 = sadd.s32 %s96, 1
    %p100 = scmp.eq.s32.totalorder %s20, 1
    %p101 = scmp.ne.s32.totalorder %s96, %s98
    %p102 = scmp.eq.s32.totalorder %s20, 0
    %p103 = por %p101, %p102
    %p104 = scmp.ne.s32.totalorder %s96, %s98
    %p105 = scmp.eq.s32.totalorder %s25, 1
    %p106 = por %p104, %p105
    %p107 = scmp.ne.s32.totalorder %s98, %s99
    %p108 = scmp.eq.s32.totalorder %s25, 0
    %p109 = por %p107, %p108
    %p110 = scmp.ne.s32.totalorder %s98, %s99
    %p111 = scmp.eq.s32.totalorder %s26, 1
    %p112 = por %p110, %p111
    %p114 = scmp.ne.s32.totalorder %s99, %s113
    %p115 = scmp.eq.s32.totalorder %s26, 0
    %p116 = por %p114, %p115
    %s118 = sadd.s32 %s117, 1
    %p121 = scmp.eq.s32.totalorder %s20, 1
    %p122 = scmp.ne.s32.totalorder %s117, %s119
    %p123 = scmp.eq.s32.totalorder %s20, 0
    %p124 = por %p122, %p123
    %p125 = scmp.ne.s32.totalorder %s117, %s119
    %p126 = scmp.eq.s32.totalorder %s25, 1
    %p127 = por %p125, %p126
    %p128 = scmp.ne.s32.totalorder %s119, %s120
    %p129 = scmp.eq.s32.totalorder %s25, 0
    %p130 = por %p128, %p129
    %p131 = scmp.ne.s32.totalorder %s119, %s120
    %p132 = scmp.eq.s32.totalorder %s26, 1
    %p133 = por %p131, %p132
    %p135 = scmp.ne.s32.totalorder %s120, %s134
    %p136 = scmp.eq.s32.totalorder %s26, 0
    %p137 = por %p135, %p136
    %s139 = sadd.s32 %s138, 1
    %p142 = scmp.eq.s32.totalorder %s20, 1
    %p143 = scmp.ne.s32.totalorder %s138, %s140
    %p144 = scmp.eq.s32.totalorder %s20, 0
    %p145 = por %p143, %p144
    %p146 = scmp.ne.s32.totalorder %s138, %s140
    %p147 = scmp.eq.s32.totalorder %s25, 1
    %p148 = por %p146, %p147
    %p149 = scmp.ne.s32.totalorder %s140, %s141
    %p150 = scmp.eq.s32.totalorder %s25, 0
    %p151 = por %p149, %p150
    %p152 = scmp.ne.s32.totalorder %s140, %s141
    %p153 = scmp.eq.s32.totalorder %s26, 1
    %p154 = por %p152, %p153
    %p156 = scmp.ne.s32.totalorder %s141, %s155
    %p157 = scmp.eq.s32.totalorder %s26, 0
    %p158 = por %p156, %p157
    %s160 = sadd.s32 %s159, 1
    %p163 = scmp.eq.s32.totalorder %s20, 1
    %p164 = scmp.ne.s32.totalorder %s159, %s161
    %p165 = scmp.eq.s32.totalorder %s20, 0
    %p166 = por %p164, %p165
    %p167 = scmp.ne.s32.totalorder %s159, %s161
    %p168 = scmp.eq.s32.totalorder %s25, 1
    %p169 = por %p167, %p168
    %p170 = scmp.ne.s32.totalorder %s161, %s162
    %p171 = scmp.eq.s32.totalorder %s25, 0
    %p172 = por %p170, %p171
    %p173 = scmp.ne.s32.totalorder %s161, %s162
    %p174 = scmp.eq.s32.totalorder %s26, 1
    %p175 = por %p173, %p174
    %p177 = scmp.ne.s32.totalorder %s162, %s176
    %p178 = scmp.eq.s32.totalorder %s26, 0
    %p179 = por %p177, %p178
    %s181 = sadd.s32 %s180, 1
    %p184 = scmp.eq.s32.totalorder %s20, 1
    %p185 = scmp.ne.s32.totalorder %s180, %s182
    %p186 = scmp.eq.s32.totalorder %s20, 0
    %p187 = por %p185, %p186
    %p188 = scmp.ne.s32.totalorder %s180, %s182
    %p189 = scmp.eq.s32.totalorder %s25, 1
    %p190 = por %p188, %p189
    %p191 = scmp.ne.s32.totalorder %s182, %s183
    %p192 = scmp.eq.s32.totalorder %s25, 0
    %p193 = por %p191, %p192
    %p194 = scmp.ne.s32.totalorder %s182, %s183
    %p195 = scmp.eq.s32.totalorder %s26, 1
    %p196 = por %p194, %p195
    %p198 = scmp.ne.s32.totalorder %s183, %s197
    %p199 = scmp.eq.s32.totalorder %s26, 0
    %p200 = por %p198, %p199
    %s202 = sadd.s32 %s201, 1
    %p205 = scmp.eq.s32.totalorder %s20, 1
    %p206 = scmp.ne.s32.totalorder %s201, %s203
    %p207 = scmp.eq.s32.totalorder %s20, 0
    %p208 = por %p206, %p207
    %p209 = scmp.ne.s32.totalorder %s201, %s203
    %p210 = scmp.eq.s32.totalorder %s25, 1
    %p211 = por %p209, %p210
    %p212 = scmp.ne.s32.totalorder %s203, %s204
    %p213 = scmp.eq.s32.totalorder %s25, 0
    %p214 = por %p212, %p213
    %p215 = scmp.ne.s32.totalorder %s203, %s204
    %p216 = scmp.eq.s32.totalorder %s26, 1
    %p217 = por %p215, %p216
    %p219 = scmp.ne.s32.totalorder %s204, %s218
    %p220 = scmp.eq.s32.totalorder %s26, 0
    %p221 = por %p219, %p220
    %s223 = sadd.s32 %s222, 1
    %p226 = scmp.eq.s32.totalorder %s20, 1
    %p227 = scmp.ne.s32.totalorder %s222, %s224
    %p228 = scmp.eq.s32.totalorder %s20, 0
    %p229 = por %p227, %p228
    %p230 = scmp.ne.s32.totalorder %s222, %s224
    %p231 = scmp.eq.s32.totalorder %s25, 1
    %p232 = por %p230, %p231
    %p233 = scmp.ne.s32.totalorder %s224, %s225
    %p234 = scmp.eq.s32.totalorder %s25, 0
    %p235 = por %p233, %p234
    %p236 = scmp.ne.s32.totalorder %s224, %s225
    %p237 = scmp.eq.s32.totalorder %s26, 1
    %p238 = por %p236, %p237
    %p240 = scmp.ne.s32.totalorder %s225, %s239
    %p241 = scmp.eq.s32.totalorder %s26, 0
    %p242 = por %p240, %p241
    %s244 = sadd.s32 %s243, 1
    %p247 = scmp.eq.s32.totalorder %s20, 1
    %p248 = scmp.ne.s32.totalorder %s243, %s245
    %p249 = scmp.eq.s32.totalorder %s20, 0
    %p250 = por %p248, %p249
    %p251 = scmp.ne.s32.totalorder %s243, %s245
    %p252 = scmp.eq.s32.totalorder %s25, 1
    %p253 = por %p251, %p252
    %p254 = scmp.ne.s32.totalorder %s245, %s246
    %p255 = scmp.eq.s32.totalorder %s25, 0
    %p256 = por %p254, %p255
    %p257 = scmp.ne.s32.totalorder %s245, %s246
    %p258 = scmp.eq.s32.totalorder %s26, 1
    %p259 = por %p257, %p258
    %p261 = scmp.ne.s32.totalorder %s246, %s260
    %p262 = scmp.eq.s32.totalorder %s26, 0
    %p263 = por %p261, %p262
    %s265 = sadd.s32 %s264, 1
    %p268 = scmp.eq.s32.totalorder %s20, 1
    %p269 = scmp.ne.s32.totalorder %s264, %s266
    %p270 = scmp.eq.s32.totalorder %s20, 0
    %p271 = por %p269, %p270
    %p272 = scmp.ne.s32.totalorder %s264, %s266
    %p273 = scmp.eq.s32.totalorder %s25, 1
    %p274 = por %p272, %p273
    %p275 = scmp.ne.s32.totalorder %s266, %s267
    %p276 = scmp.eq.s32.totalorder %s25, 0
    %p277 = por %p275, %p276
    %p278 = scmp.ne.s32.totalorder %s266, %s267
    %p279 = scmp.eq.s32.totalorder %s26, 1
    %p280 = por %p278, %p279
    %p282 = scmp.ne.s32.totalorder %s267, %s281
    %p283 = scmp.eq.s32.totalorder %s26, 0
    %p284 = por %p282, %p283
    %s285 = ssub.s32 %s20, %s27
    %p286 = scmp.eq.s32.totalorder %s285, 0
    %s288 = sadd.s32 %s287, 1
    %s289 = scalar_select %p286, %s287, %s288
    %p292 = pneg %p286
    %p293 = scmp.eq.s32.totalorder %s20, 1
    %p294 = por %p292, %p293
    %p295 = scmp.ne.s32.totalorder %s287, %s290
    %p296 = scmp.eq.s32.totalorder %s20, 0
    %p297 = por %p295, %p296
    %p298 = scmp.ne.s32.totalorder %s287, %s290
    %p299 = scmp.eq.s32.totalorder %s25, 1
    %p300 = por %p298, %p299
    %p301 = scmp.ne.s32.totalorder %s290, %s291
    %p302 = scmp.eq.s32.totalorder %s25, 0
    %p303 = por %p301, %p302
    %p304 = scmp.ne.s32.totalorder %s290, %s291
    %p305 = scmp.eq.s32.totalorder %s26, 1
    %p306 = por %p304, %p305
    %p308 = scmp.ne.s32.totalorder %s291, %s307
    %p309 = scmp.eq.s32.totalorder %s26, 0
    %p310 = por %p308, %p309
    %s311 = ssub.s32 %s20, %s27
    %p312 = scmp.eq.s32.totalorder %s311, 0
    %s314 = sadd.s32 %s313, 1
    %s315 = scalar_select %p312, %s313, %s314
    %p318 = pneg %p312
    %p319 = scmp.eq.s32.totalorder %s20, 1
    %p320 = por %p318, %p319
    %p321 = scmp.ne.s32.totalorder %s313, %s316
    %p322 = scmp.eq.s32.totalorder %s20, 0
    %p323 = por %p321, %p322
    %p324 = scmp.ne.s32.totalorder %s313, %s316
    %p325 = scmp.eq.s32.totalorder %s25, 1
    %p326 = por %p324, %p325
    %p327 = scmp.ne.s32.totalorder %s316, %s317
    %p328 = scmp.eq.s32.totalorder %s25, 0
    %p329 = por %p327, %p328
    %p330 = scmp.ne.s32.totalorder %s316, %s317
    %p331 = scmp.eq.s32.totalorder %s26, 1
    %p332 = por %p330, %p331
    %p334 = scmp.ne.s32.totalorder %s317, %s333
    %p335 = scmp.eq.s32.totalorder %s26, 0
    %p336 = por %p334, %p335
    %p337 = scmp.le.s32.totalorder 1, %s20
    %p338 = scmp.lt.s32.totalorder %s20, 3
    %p339 = pnand %p337, %p338
    %p340 = pneg %p339
    // Predicated region
    $region9: #{inferencer_forward.1} parent=5 // pred_check
      _
    $region10: #{inferencer_forward.1} parent=5 // pred_check_branch
      %342 = sbr.rel (%p339) target = $region12
    $region11: #{inferencer_forward.1} parent=5 // pred_region
      %s343 = ssub.s32 %s20, 1
      // Predicated region
      $region13: #{inferencer_forward.1} parent=11 // pred_check
        %p344 = pneg %p67
      $region14: #{inferencer_forward.1} parent=11 // pred_check_branch
        %346 = sbr.rel (%p344) target = $region16
      $region15: #{inferencer_forward.1} parent=11 // pred_region
        _
      $region16: #{inferencer_forward.1} parent=11 // pred_fallthru
        _
      // Predicated region
      $region17: #{inferencer_forward.1} parent=11 // pred_check
        %p347 = pneg %p88
      $region18: #{inferencer_forward.1} parent=11 // pred_check_branch
        %349 = sbr.rel (%p347) target = $region20
      $region19: #{inferencer_forward.1} parent=11 // pred_region
        _
      $region20: #{inferencer_forward.1} parent=11 // pred_fallthru
        _
      // Predicated region
      $region21: #{inferencer_forward.1} parent=11 // pred_check
        %p350 = pneg %p109
      $region22: #{inferencer_forward.1} parent=11 // pred_check_branch
        %352 = sbr.rel (%p350) target = $region24
      $region23: #{inferencer_forward.1} parent=11 // pred_region
        _
      $region24: #{inferencer_forward.1} parent=11 // pred_fallthru
        _
      // Predicated region
      $region25: #{inferencer_forward.1} parent=11 // pred_check
        %p353 = pneg %p130
      $region26: #{inferencer_forward.1} parent=11 // pred_check_branch
        %355 = sbr.rel (%p353) target = $region28
      $region27: #{inferencer_forward.1} parent=11 // pred_region
        _
      $region28: #{inferencer_forward.1} parent=11 // pred_fallthru
        _
      // Predicated region
      $region29: #{inferencer_forward.1} parent=11 // pred_check
        %p356 = pneg %p151
      $region30: #{inferencer_forward.1} parent=11 // pred_check_branch
        %358 = sbr.rel (%p356) target = $region32
      $region31: #{inferencer_forward.1} parent=11 // pred_region
        _
      $region32: #{inferencer_forward.1} parent=11 // pred_fallthru
        _
      // Predicated region
      $region33: #{inferencer_forward.1} parent=11 // pred_check
        %p359 = pneg %p172
      $region34: #{inferencer_forward.1} parent=11 // pred_check_branch
        %361 = sbr.rel (%p359) target = $region36
      $region35: #{inferencer_forward.1} parent=11 // pred_region
        _
      $region36: #{inferencer_forward.1} parent=11 // pred_fallthru
        _
      // Predicated region
      $region37: #{inferencer_forward.1} parent=11 // pred_check
        %p362 = pneg %p193
      $region38: #{inferencer_forward.1} parent=11 // pred_check_branch
        %364 = sbr.rel (%p362) target = $region40
      $region39: #{inferencer_forward.1} parent=11 // pred_region
        _
      $region40: #{inferencer_forward.1} parent=11 // pred_fallthru
        _
      // Predicated region
      $region41: #{inferencer_forward.1} parent=11 // pred_check
        %p365 = pneg %p214
      $region42: #{inferencer_forward.1} parent=11 // pred_check_branch
        %367 = sbr.rel (%p365) target = $region44
      $region43: #{inferencer_forward.1} parent=11 // pred_region
        _
      $region44: #{inferencer_forward.1} parent=11 // pred_fallthru
        _
      // Predicated region
      $region45: #{inferencer_forward.1} parent=11 // pred_check
        %p368 = pneg %p235
      $region46: #{inferencer_forward.1} parent=11 // pred_check_branch
        %370 = sbr.rel (%p368) target = $region48
      $region47: #{inferencer_forward.1} parent=11 // pred_region
        _
      $region48: #{inferencer_forward.1} parent=11 // pred_fallthru
        _
      // Predicated region
      $region49: #{inferencer_forward.1} parent=11 // pred_check
        %p371 = pneg %p256
      $region50: #{inferencer_forward.1} parent=11 // pred_check_branch
        %373 = sbr.rel (%p371) target = $region52
      $region51: #{inferencer_forward.1} parent=11 // pred_region
        _
      $region52: #{inferencer_forward.1} parent=11 // pred_fallthru
        _
      // Predicated region
      $region53: #{inferencer_forward.1} parent=11 // pred_check
        %p374 = pneg %p277
      $region54: #{inferencer_forward.1} parent=11 // pred_check_branch
        %376 = sbr.rel (%p374) target = $region56
      $region55: #{inferencer_forward.1} parent=11 // pred_region
        _
      $region56: #{inferencer_forward.1} parent=11 // pred_fallthru
        _
    $region12: #{inferencer_forward.1} parent=5 // pred_fallthru
      _
    %p377 = scmp.lt.s32.totalorder %s20, 2
    // Predicated region
    $region57: #{inferencer_forward.1} parent=5 // pred_check
      %p378 = pneg %p377
    $region58: #{inferencer_forward.1} parent=5 // pred_check_branch
      %380 = sbr.rel (%p378) target = $region60
    $region59: #{inferencer_forward.1} parent=5 // pred_region
      // Predicated region
      $region61: #{inferencer_forward.1} parent=59 // pred_check
        %p381 = pneg %p40
      $region62: #{inferencer_forward.1} parent=59 // pred_check_branch
        %383 = sbr.rel (%p381) target = $region64
      $region63: #{inferencer_forward.1} parent=59 // pred_region
        %p384 = scmp.lt.s32.totalorder %s20, 1
        %s385 = scalar_select %p384, %s20, 1
        %s386 = smul.addr %s385, 4
        %s387 = smul.addr %s386, 8
        %s388 = scalar_lea.vmem %s0, %s387
      $region64: #{inferencer_forward.1} parent=59 // pred_fallthru
        _
    $region60: #{inferencer_forward.1} parent=5 // pred_fallthru
      _
    %p389 = scmp.le.s32.totalorder 1, %s20
    %p390 = scmp.lt.s32.totalorder %s20, 3
    %p391 = pnand %p389, %p390
    %p392 = pneg %p391
    // Predicated region
    $region65: #{inferencer_forward.1} parent=5 // pred_check
      _
    $region66: #{inferencer_forward.1} parent=5 // pred_check_branch
      %394 = sbr.rel (%p391) target = $region68
    $region67: #{inferencer_forward.1} parent=5 // pred_region
      %s395 = ssub.s32 %s20, 1
      %p396 = scmp.lt.s32.totalorder %s25, 1
      %s397 = scalar_select %p396, %s25, 1
      %s398 = smul.addr %s397, 4
      %s399 = smul.addr %s398, 8
      %s400 = scalar_lea.vmem %s0, %s399
      %p401 = pneg %p46
      %p402 = pneg %p43
      %p403 = pneg %p67
      %p404 = pneg %p64
      %p405 = pneg %p88
      %p406 = pneg %p85
      %p407 = pneg %p109
      %p408 = pneg %p106
      %p409 = pneg %p130
      %p410 = pneg %p127
      %p411 = pneg %p151
      %p412 = pneg %p148
      %p413 = pneg %p172
      %p414 = pneg %p169
      %p415 = pneg %p193
      %p416 = pneg %p190
      %p417 = pneg %p214
      %p418 = pneg %p211
      %p419 = pneg %p235
      %p420 = pneg %p232
      %p421 = pneg %p256
      %p422 = pneg %p253
      %p423 = pneg %p277
      %p424 = pneg %p274
      %p425 = pneg %p303
      %p426 = pneg %p300
      %p427 = scmp.lt.s32.totalorder %s25, 1
      %s428 = scalar_select %p427, %s25, 1
      %s429 = smul.addr %s428, 8
      %s430 = scalar_lea.vmem %s12, %s429
      %p431 = pneg %p329
      %p432 = pneg %p326
      %p433 = scmp.lt.s32.totalorder %s25, 1
      %s434 = scalar_select %p433, %s25, 1
      %s435 = smul.addr %s434, 8
      %s436 = scalar_lea.vmem %s13, %s435
      %p437 = scmp.lt.s32.totalorder %s25, 1
      %s438 = scalar_select %p437, %s25, 1
      %s439 = smul.addr %s438, 4
      %s440 = smul.addr %s439, 8
      %s441 = scalar_lea.vmem %s0, %s440
      %p442 = scmp.lt.s32.totalorder %s25, 1
      %s443 = scalar_select %p442, %s25, 1
      %s444 = smul.addr %s443, 8
      %s445 = scalar_lea.vmem %s12, %s444
      %p446 = scmp.lt.s32.totalorder %s25, 1
      %s447 = scalar_select %p446, %s25, 1
      %s448 = smul.addr %s447, 8
      %s449 = scalar_lea.vmem %s13, %s448
      %v450 = vld [vmem:[%s441] sm:$0xff]
      %v451 = vld [vmem:[%s441 + $0x8] sm:$0xff]
      %v452 = vld [vmem:[%s441 + $0x10] sm:$0xff]
      %v453 = vld [vmem:[%s441 + $0x18] sm:$0xff]
      %v454 = vld [vmem:[%s2] sm:$0xff]
      %v455 = vld [vmem:[%s2 + $0x8] sm:$0xff]
      %v456 = vld [vmem:[%s2 + $0x10] sm:$0xff]
      %v457 = vld [vmem:[%s2 + $0x18] sm:$0xff]
      %v458 = vld [vmem:[%s2 + $0x20] sm:$0xff]
      %v459 = vld [vmem:[%s2 + $0x28] sm:$0xff]
      %v460 = vld [vmem:[%s2 + $0x30] sm:$0xff]
      %v461 = vld [vmem:[%s2 + $0x38] sm:$0xff]
      %v462 = vld [vmem:[%s2 + $0x40] sm:$0xff]
      %v463 = vld [vmem:[%s2 + $0x48] sm:$0xff]
      %v464 = vld [vmem:[%s2 + $0x50] sm:$0xff]
      %v465 = vld [vmem:[%s2 + $0x58] sm:$0xff]
      %v466 = vld [vmem:[%s2 + $0x60] sm:$0xff]
      %v467 = vld [vmem:[%s2 + $0x68] sm:$0xff]
      %v468 = vld [vmem:[%s2 + $0x70] sm:$0xff]
      %v469 = vld [vmem:[%s2 + $0x78] sm:$0xff]
      %v470 = vld [vmem:[%s2 + $0x80] sm:$0xff]
      %v471 = vld [vmem:[%s2 + $0x88] sm:$0xff]
      %v472 = vld [vmem:[%s2 + $0x90] sm:$0xff]
      %v473 = vld [vmem:[%s2 + $0x98] sm:$0xff]
      %v474 = vld [vmem:[%s2 + $0xa0] sm:$0xff]
      %v475 = vld [vmem:[%s2 + $0xa8] sm:$0xff]
      %v476 = vld [vmem:[%s2 + $0xb0] sm:$0xff]
      %v477 = vld [vmem:[%s2 + $0xb8] sm:$0xff]
      %v478 = vld [vmem:[%s1] sm:$0xff]
      %v479 = vld [vmem:[%s1 + $0x8] sm:$0xff]
      %vm480 = vcmask 523264
      %v482 = vsel %vm480, %v451, 0
      %v485 = vsel %vm480, %v453, 0
      %487 = vmatpush.msra.mxu0 %v469
      %488 = vmatpush.msra.mxu0 %v468
      %489 = vmatpush.msra.mxu0 %v467
      %490 = vmatpush.msra.mxu0 %v466
      %491 = vmatpush.msra.mxu0 %v465
      %492 = vmatpush.msra.mxu0 %v464
      %493 = vmatpush.msra.mxu0 %v463
      %494 = vmatpush.msra.mxu0 %v462
      %495 = vmatpush.msra.mxu0 %v461
      %496 = vmatpush.msra.mxu0 %v460
      %497 = vmatpush.msra.mxu0 %v459
      %498 = vmatpush.msra.mxu0 %v458
      %499 = vmatpush.msra.mxu0 %v457
      %500 = vmatpush.msra.mxu0 %v456
      %501 = vmatpush.msra.mxu0 %v455
      %502 = vmatpush.msra.mxu0 %v454
      %503 = vmatmul.f32.gmra.mxu0 %v450
      %v504 = vpop.f32.mrf.mxu0
      %v505 = vadd.f32 %v478, %v504
      %506 = vmatmul.f32.gmra.mxu0 %v452
      %v507 = vpop.f32.mrf.mxu0
      %v508 = vadd.f32 %v479, %v507
      %509 = vdwg.mxu0
      %510 = vmatpush.msra.mxu0 0.0
      %511 = vmatpush.msra.mxu0 0.0
      %512 = vmatpush.msra.mxu0 0.0
      %513 = vmatpush.msra.mxu0 0.0
      %514 = vmatpush.msra.mxu0 0.0
      %515 = vmatpush.msra.mxu0 0.0
      %516 = vmatpush.msra.mxu0 0.0
      %517 = vmatpush.msra.mxu0 0.0
      %518 = vmatpush.msra.mxu0 %v477
      %519 = vmatpush.msra.mxu0 %v476
      %520 = vmatpush.msra.mxu0 %v475
      %521 = vmatpush.msra.mxu0 %v474
      %522 = vmatpush.msra.mxu0 %v473
      %523 = vmatpush.msra.mxu0 %v472
      %524 = vmatpush.msra.mxu0 %v471
      %525 = vmatpush.msra.mxu0 %v470
      %526 = vmatmul.f32.gmra.mxu0 %v482
      %v527 = vpop.f32.mrf.mxu0
      %v528 = vadd.f32 %v505, %v527
      %529 = vmatmul.f32.gmra.mxu0 %v485
      %v530 = vpop.f32.mrf.mxu0
      %v531 = vadd.f32 %v508, %v530
      %532 = vdwg.mxu0
      %v533 = vlaneseq
      %v534 = vand.u32 %v533, 127
      %vm535 = vcmp.ge.s32.totalorder %v534, 5
      %vm536 = vcmp.lt.s32.totalorder %v534, 8
      %vm537 = vmand %vm535, %vm536
      %v538 = vsel %vm537, -1e+30, 0.0
      %v539 = vld [vmem:[%s11] sm:$0x1]
      %v540 = vld [vmem:[%s11 + $0x1] sm:$0x1]
      %vm541 = vcmask 261120
      %v542 = vsel %vm541, %v528, 0.0
      %543 = vadd.xlane.f32.xlu0 %v542
      %v544 = vpop.xlane.xlu0 %543
      %v545 = vsel %vm541, %v531, 0.0
      %546 = vadd.xlane.f32.xlu0 %v545
      %v547 = vpop.xlane.xlu0 %546
      %v548 = vrcp.pop 32.0
      %v549 = vmul.f32 32.0, %v548
      %v550 = vsub.f32 1.0, %v549
      %v551 = vmul.f32 %v548, %v550
      %v552 = vadd.f32 %v548, %v551
      %vm553 = vweird.f32 %v548
      %v554 = vsel %vm553, %v548, %v552
      %v555 = vmul.f32 %v544, %v554
      %v556 = vmul.f32 %v547, %v554
      %v557 = vmul.f32 %v528, %v528
      %v558 = vmul.f32 %v531, %v531
      %v559 = vsel %vm541, %v557, 0.0
      %560 = vadd.xlane.f32.xlu0 %v559
      %v561 = vpop.xlane.xlu0 %560
      %v562 = vsel %vm541, %v558, 0.0
      %563 = vadd.xlane.f32.xlu0 %v562
      %v564 = vpop.xlane.xlu0 %563
      %v565 = vmul.f32 %v561, %v554
      %v566 = vmul.f32 %v564, %v554
      %v567 = vsub.f32 %v528, %v555
      %v568 = vsub.f32 %v531, %v556
      %v569 = vmul.f32 %v555, %v555
      %v570 = vmul.f32 %v556, %v556
      %v571 = vsub.f32 %v565, %v569
      %v572 = vsub.f32 %v566, %v570
      %v573 = vadd.f32 %v571, 1e-12
      %v574 = vadd.f32 %v572, 1e-12
      %v575 = vrsqrt.pop %v573
      %v576 = vmul.f32 %v575, %v573
      %v577 = vmul.f32 %v576, %v575
      %v578 = vmul.f32 0.5, %v577
      %v579 = vsub.f32 1.5, %v578
      %v580 = vmul.f32 %v575, %v579
      %vm581 = vweird.f32 %v573
      %vm582 = vweird.f32 %v575
      %vm583 = vmor %vm581, %vm582
      %v584 = vsel %vm583, %v575, %v580
      %v585 = vrsqrt.pop %v574
      %v586 = vmul.f32 %v585, %v574
      %v587 = vmul.f32 %v586, %v585
      %v588 = vmul.f32 0.5, %v587
      %v589 = vsub.f32 1.5, %v588
      %v590 = vmul.f32 %v585, %v589
      %vm591 = vweird.f32 %v574
      %vm592 = vweird.f32 %v585
      %vm593 = vmor %vm591, %vm592
      %v594 = vsel %vm593, %v585, %v590
      %v595 = vmul.f32 %v567, %v584
      %v596 = vmul.f32 %v568, %v594
      %v597 = vperm.slane %v539, 0
      %v598 = vmul.f32 %v595, %v597
      %v599 = vmul.f32 %v596, %v597
      %v600 = vperm.slane %v540, 0
      %v601 = vadd.f32 %v598, %v600
      %v602 = vadd.f32 %v599, %v600
      %v603 = vld [vmem:[%s3] sm:$0xff]
      %v604 = vld [vmem:[%s3 + $0x8] sm:$0xff]
      %v605 = vld [vmem:[%s3 + $0x10] sm:$0xff]
      %v606 = vld [vmem:[%s3 + $0x18] sm:$0xff]
      %v607 = vld [vmem:[%s11 + $0x2] sm:$0x1]
      %v608 = vperm.slane %v607, 0
      %v610 = vsel %vm541, %v601, 0
      %v613 = vsel %vm541, %v602, 0
      %615 = vmatpush.msra.mxu0 0.0
      %616 = vmatpush.msra.mxu0 0.0
      %617 = vmatpush.msra.mxu0 0.0
      %618 = vmatpush.msra.mxu0 0.0
      %619 = vmatpush.msra.mxu0 0.0
      %620 = vmatpush.msra.mxu0 0.0
      %621 = vmatpush.msra.mxu0 0.0
      %622 = vmatpush.msra.mxu0 0.0
      %623 = vmatpush.msra.mxu0 0.0
      %624 = vmatpush.msra.mxu0 0.0
      %625 = vmatpush.msra.mxu0 0.0
      %626 = vmatpush.msra.mxu0 0.0
      %627 = vmatpush.msra.mxu0 %v606
      %628 = vmatpush.msra.mxu0 %v605
      %629 = vmatpush.msra.mxu0 %v604
      %630 = vmatpush.msra.mxu0 %v603
      %631 = vmatmul.f32.gmra.mxu0 %v610
      %v632 = vpop.f32.mrf.mxu0
      %v633 = vadd.f32 %v608, %v632
      %634 = vmatmul.f32.gmra.mxu0 %v613
      %v635 = vpop.f32.mrf.mxu0
      %v636 = vadd.f32 %v608, %v635
      %637 = vdwg.mxu0
      %640 = vrot.lane.b32.xlu0 %v633, 96
      %v641 = vpop.permute.xlu0 %640
      %642 = vrot.lane.b32.xlu0 %v636, 96
      %v643 = vpop.permute.xlu0 %642
      %vm644 = vcmask 130048
      %v645 = vsel %vm644, %v633, 0
      %v647 = vsel %vm644, %v636, 0
      %v649 = vsel %vm644, %v641, 0
      %v651 = vsel %vm644, %v643, 0
      %653 = vmatpush.xpose.msra.mxu0 0.0
      %654 = vmatpush.xpose.msra.mxu0 0.0
      %655 = vmatpush.xpose.msra.mxu0 0.0
      %656 = vmatpush.xpose.msra.mxu0 0.0
      %657 = vmatpush.xpose.msra.mxu0 0.0
      %658 = vmatpush.xpose.msra.mxu0 0.0
      %659 = vmatpush.xpose.msra.mxu0 0.0
      %660 = vmatpush.xpose.msra.mxu0 0.0
      %661 = vmatpush.xpose.msra.mxu0 0.0
      %662 = vmatpush.xpose.msra.mxu0 0.0
      %663 = vmatpush.xpose.msra.mxu0 0.0
      %664 = vmatpush.xpose.msra.mxu0 0.0
      %665 = vmatpush.xpose.msra.mxu0 0.0
      %666 = vmatpush.xpose.msra.mxu0 0.0
      %667 = vmatpush.xpose.msra.mxu0 %v651
      %668 = vmatpush.xpose.msra.mxu0 %v649
      %669 = vmatmul.f32.gmra.mxu0 %v645
      %v670 = vpop.f32.mrf.mxu0
      %v671 = vadd.f32 0.0, %v670
      %672 = vmatmul.f32.gmra.mxu0 %v647
      %v673 = vpop.f32.mrf.mxu0
      %v674 = vadd.f32 0.0, %v673
      %675 = vdwg.mxu0
      %v676 = vmul.f32 %v671, 0.25
      %v677 = vmul.f32 %v674, 0.25
      %v678 = vadd.f32 %v676, %v538
      %v679 = vadd.f32 %v677, %v538
      %v680 = vsel %vm644, %v678, -inf
      %681 = vmax.xlane.f32.xlu0 %v680
      %v682 = vpop.xlane.xlu0 %681
      %v683 = vsel %vm644, %v679, -inf
      %684 = vmax.xlane.f32.xlu0 %v683
      %v685 = vpop.xlane.xlu0 %684
      %v686 = vsub.f32 %v678, %v682
      %v687 = vsub.f32 %v679, %v685
      %v688 = vmul.f32 %v686, 1.442695
      %v689 = vpow.pop %v688
      %v690 = vmul.f32 %v687, 1.442695
      %v691 = vpow.pop %v690
      %v692 = vsel %vm644, %v689, 0.0
      %693 = vadd.xlane.f32.xlu0 %v692
      %v694 = vpop.xlane.xlu0 %693
      %v695 = vsel %vm644, %v691, 0.0
      %696 = vadd.xlane.f32.xlu0 %v695
      %v697 = vpop.xlane.xlu0 %696
      %v698 = vrcp.pop %v694
      %v699 = vmul.f32 %v694, %v698
      %v700 = vsub.f32 1.0, %v699
      %v701 = vmul.f32 %v698, %v700
      %v702 = vadd.f32 %v698, %v701
      %vm703 = vweird.f32 %v694
      %vm704 = vweird.f32 %v698
      %vm705 = vmor %vm703, %vm704
      %v706 = vsel %vm705, %v698, %v702
      %v707 = vand.u32 2147483647, %v694
      %vm708 = vcmp.eq.f32.partialorder %v707, 8.507059e+37
      %v709 = vand.u32 %v694, 2147483648
      %v710 = vor.u32 1.1754944e-38, %v709
      %v711 = vsel %vm708, %v710, %v706
      %v712 = vmul.f32 %v689, %v711
      %v713 = vrcp.pop %v697
      %v714 = vmul.f32 %v697, %v713
      %v715 = vsub.f32 1.0, %v714
      %v716 = vmul.f32 %v713, %v715
      %v717 = vadd.f32 %v713, %v716
      %vm718 = vweird.f32 %v697
      %vm719 = vweird.f32 %v713
      %vm720 = vmor %vm718, %vm719
      %v721 = vsel %vm720, %v713, %v717
      %v722 = vand.u32 2147483647, %v697
      %vm723 = vcmp.eq.f32.partialorder %v722, 8.507059e+37
      %v724 = vand.u32 %v697, 2147483648
      %v725 = vor.u32 1.1754944e-38, %v724
      %v726 = vsel %vm723, %v725, %v721
      %v727 = vmul.f32 %v691, %v726
      %728 = vrot.lane.b32.xlu0 %v633, 64
      %v729 = vpop.permute.xlu0 %728
      %730 = vrot.lane.b32.xlu0 %v636, 64
      %v731 = vpop.permute.xlu0 %730
      %v735 = vsel %vm644, %v712, 0
      %v738 = vsel %vm644, %v727, 0
      %740 = vmatpush.msra.mxu0 0.0
      %741 = vmatpush.msra.mxu0 0.0
      %742 = vmatpush.msra.mxu0 0.0
      %743 = vmatpush.msra.mxu0 0.0
      %744 = vmatpush.msra.mxu0 0.0
      %745 = vmatpush.msra.mxu0 0.0
      %746 = vmatpush.msra.mxu0 0.0
      %747 = vmatpush.msra.mxu0 0.0
      %748 = vmatpush.msra.mxu0 0.0
      %749 = vmatpush.msra.mxu0 0.0
      %750 = vmatpush.msra.mxu0 0.0
      %751 = vmatpush.msra.mxu0 0.0
      %752 = vmatpush.msra.mxu0 0.0
      %753 = vmatpush.msra.mxu0 0.0
      %754 = vmatpush.msra.mxu0 %v731
      %755 = vmatpush.msra.mxu0 %v729
      %756 = vmatmul.f32.gmra.mxu0 %v735
      %v757 = vpop.f32.mrf.mxu0
      %v758 = vadd.f32 0.0, %v757
      %759 = vmatmul.f32.gmra.mxu0 %v738
      %v760 = vpop.f32.mrf.mxu0
      %v761 = vadd.f32 0.0, %v760
      %762 = vdwg.mxu0
      %763 = vrot.lane.b32.xlu0 %v633, 112
      %v764 = vpop.permute.xlu0 %763
      %765 = vrot.lane.b32.xlu0 %v636, 112
      %v766 = vpop.permute.xlu0 %765
      %767 = vrot.lane.b32.xlu0 %v633, 80
      %v768 = vpop.permute.xlu0 %767
      %769 = vrot.lane.b32.xlu0 %v636, 80
      %v770 = vpop.permute.xlu0 %769
      %v771 = vsel %vm644, %v764, 0
      %v773 = vsel %vm644, %v766, 0
      %v775 = vsel %vm644, %v768, 0
      %v777 = vsel %vm644, %v770, 0
      %779 = vmatpush.xpose.msra.mxu0 0.0
      %780 = vmatpush.xpose.msra.mxu0 0.0
      %781 = vmatpush.xpose.msra.mxu0 0.0
      %782 = vmatpush.xpose.msra.mxu0 0.0
      %783 = vmatpush.xpose.msra.mxu0 0.0
      %784 = vmatpush.xpose.msra.mxu0 0.0
      %785 = vmatpush.xpose.msra.mxu0 0.0
      %786 = vmatpush.xpose.msra.mxu0 0.0
      %787 = vmatpush.xpose.msra.mxu0 0.0
      %788 = vmatpush.xpose.msra.mxu0 0.0
      %789 = vmatpush.xpose.msra.mxu0 0.0
      %790 = vmatpush.xpose.msra.mxu0 0.0
      %791 = vmatpush.xpose.msra.mxu0 0.0
      %792 = vmatpush.xpose.msra.mxu0 0.0
      %793 = vmatpush.xpose.msra.mxu0 %v777
      %794 = vmatpush.xpose.msra.mxu0 %v775
      %795 = vmatmul.f32.gmra.mxu0 %v771
      %v796 = vpop.f32.mrf.mxu0
      %v797 = vadd.f32 0.0, %v796
      %798 = vmatmul.f32.gmra.mxu0 %v773
      %v799 = vpop.f32.mrf.mxu0
      %v800 = vadd.f32 0.0, %v799
      %801 = vdwg.mxu0
      %v802 = vmul.f32 %v797, 0.25
      %v803 = vmul.f32 %v800, 0.25
      %v804 = vadd.f32 %v802, %v538
      %v805 = vadd.f32 %v803, %v538
      %v806 = vsel %vm644, %v804, -inf
      %807 = vmax.xlane.f32.xlu0 %v806
      %v808 = vpop.xlane.xlu0 %807
      %v809 = vsel %vm644, %v805, -inf
      %810 = vmax.xlane.f32.xlu0 %v809
      %v811 = vpop.xlane.xlu0 %810
      %v812 = vsub.f32 %v804, %v808
      %v813 = vsub.f32 %v805, %v811
      %v814 = vmul.f32 %v812, 1.442695
      %v815 = vpow.pop %v814
      %v816 = vmul.f32 %v813, 1.442695
      %v817 = vpow.pop %v816
      %v818 = vsel %vm644, %v815, 0.0
      %819 = vadd.xlane.f32.xlu0 %v818
      %v820 = vpop.xlane.xlu0 %819
      %v821 = vsel %vm644, %v817, 0.0
      %822 = vadd.xlane.f32.xlu0 %v821
      %v823 = vpop.xlane.xlu0 %822
      %v824 = vrcp.pop %v820
      %v825 = vmul.f32 %v820, %v824
      %v826 = vsub.f32 1.0, %v825
      %v827 = vmul.f32 %v824, %v826
      %v828 = vadd.f32 %v824, %v827
      %vm829 = vweird.f32 %v820
      %vm830 = vweird.f32 %v824
      %vm831 = vmor %vm829, %vm830
      %v832 = vsel %vm831, %v824, %v828
      %v833 = vand.u32 2147483647, %v820
      %vm834 = vcmp.eq.f32.partialorder %v833, 8.507059e+37
      %v835 = vand.u32 %v820, 2147483648
      %v836 = vor.u32 1.1754944e-38, %v835
      %v837 = vsel %vm834, %v836, %v832
      %v838 = vmul.f32 %v815, %v837
      %v839 = vrcp.pop %v823
      %v840 = vmul.f32 %v823, %v839
      %v841 = vsub.f32 1.0, %v840
      %v842 = vmul.f32 %v839, %v841
      %v843 = vadd.f32 %v839, %v842
      %vm844 = vweird.f32 %v823
      %vm845 = vweird.f32 %v839
      %vm846 = vmor %vm844, %vm845
      %v847 = vsel %vm846, %v839, %v843
      %v848 = vand.u32 2147483647, %v823
      %vm849 = vcmp.eq.f32.partialorder %v848, 8.507059e+37
      %v850 = vand.u32 %v823, 2147483648
      %v851 = vor.u32 1.1754944e-38, %v850
      %v852 = vsel %vm849, %v851, %v847
      %v853 = vmul.f32 %v817, %v852
      %854 = vrot.lane.b32.xlu0 %v633, 48
      %v855 = vpop.permute.xlu0 %854
      %856 = vrot.lane.b32.xlu0 %v636, 48
      %v857 = vpop.permute.xlu0 %856
      %v861 = vsel %vm644, %v838, 0
      %v864 = vsel %vm644, %v853, 0
      %866 = vmatpush.msra.mxu0 0.0
      %867 = vmatpush.msra.mxu0 0.0
      %868 = vmatpush.msra.mxu0 0.0
      %869 = vmatpush.msra.mxu0 0.0
      %870 = vmatpush.msra.mxu0 0.0
      %871 = vmatpush.msra.mxu0 0.0
      %872 = vmatpush.msra.mxu0 0.0
      %873 = vmatpush.msra.mxu0 0.0
      %874 = vmatpush.msra.mxu0 0.0
      %875 = vmatpush.msra.mxu0 0.0
      %876 = vmatpush.msra.mxu0 0.0
      %877 = vmatpush.msra.mxu0 0.0
      %878 = vmatpush.msra.mxu0 0.0
      %879 = vmatpush.msra.mxu0 0.0
      %880 = vmatpush.msra.mxu0 %v857
      %881 = vmatpush.msra.mxu0 %v855
      %882 = vmatmul.f32.gmra.mxu0 %v861
      %v883 = vpop.f32.mrf.mxu0
      %v884 = vadd.f32 0.0, %v883
      %885 = vmatmul.f32.gmra.mxu0 %v864
      %v886 = vpop.f32.mrf.mxu0
      %v887 = vadd.f32 0.0, %v886
      %888 = vdwg.mxu0
      %891 = vrot.lane.b32.xlu0 %v884, 16
      %v892 = vpop.permute.xlu0 %891
      %893 = vrot.lane.b32.xlu0 %v887, 16
      %v894 = vpop.permute.xlu0 %893
      %v897 = vsel %vm644, %v758, %v892
      %v898 = vsel %vm644, %v761, %v894
      %v899 = vld [vmem:[%s4] sm:$0xff]
      %v900 = vld [vmem:[%s4 + $0x8] sm:$0xff]
      %v901 = vld [vmem:[%s4 + $0x10] sm:$0xff]
      %v902 = vld [vmem:[%s4 + $0x18] sm:$0xff]
      %v904 = vsel %vm541, %v897, 0
      %v907 = vsel %vm541, %v898, 0
      %909 = vmatpush.msra.mxu0 0.0
      %910 = vmatpush.msra.mxu0 0.0
      %911 = vmatpush.msra.mxu0 0.0
      %912 = vmatpush.msra.mxu0 0.0
      %913 = vmatpush.msra.mxu0 0.0
      %914 = vmatpush.msra.mxu0 0.0
      %915 = vmatpush.msra.mxu0 0.0
      %916 = vmatpush.msra.mxu0 0.0
      %917 = vmatpush.msra.mxu0 0.0
      %918 = vmatpush.msra.mxu0 0.0
      %919 = vmatpush.msra.mxu0 0.0
      %920 = vmatpush.msra.mxu0 0.0
      %921 = vmatpush.msra.mxu0 %v902
      %922 = vmatpush.msra.mxu0 %v901
      %923 = vmatpush.msra.mxu0 %v900
      %924 = vmatpush.msra.mxu0 %v899
      %925 = vmatmul.f32.gmra.mxu0 %v904
      %v926 = vpop.f32.mrf.mxu0
      %v927 = vadd.f32 0.0, %v926
      %928 = vmatmul.f32.gmra.mxu0 %v907
      %v929 = vpop.f32.mrf.mxu0
      %v930 = vadd.f32 0.0, %v929
      %931 = vdwg.mxu0
      %v932 = vadd.f32 %v528, %v927
      %v933 = vadd.f32 %v531, %v930
      %v934 = vld [vmem:[%s11 + $0x3] sm:$0x1]
      %v935 = vperm.slane %v934, 0
      %v936 = vadd.f32 %v932, %v935
      %v937 = vadd.f32 %v933, %v935
      %v938 = vld [vmem:[%s11 + $0x4] sm:$0x1]
      %v939 = vld [vmem:[%s11 + $0x5] sm:$0x1]
      %v940 = vsel %vm541, %v936, 0.0
      %941 = vadd.xlane.f32.xlu0 %v940
      %v942 = vpop.xlane.xlu0 %941
      %v943 = vsel %vm541, %v937, 0.0
      %944 = vadd.xlane.f32.xlu0 %v943
      %v945 = vpop.xlane.xlu0 %944
      %v946 = vmul.f32 %v942, %v554
      %v947 = vmul.f32 %v945, %v554
      %v948 = vmul.f32 %v936, %v936
      %v949 = vmul.f32 %v937, %v937
      %v950 = vsel %vm541, %v948, 0.0
      %951 = vadd.xlane.f32.xlu0 %v950
      %v952 = vpop.xlane.xlu0 %951
      %v953 = vsel %vm541, %v949, 0.0
      %954 = vadd.xlane.f32.xlu0 %v953
      %v955 = vpop.xlane.xlu0 %954
      %v956 = vmul.f32 %v952, %v554
      %v957 = vmul.f32 %v955, %v554
      %v958 = vsub.f32 %v936, %v946
      %v959 = vsub.f32 %v937, %v947
      %v960 = vmul.f32 %v946, %v946
      %v961 = vmul.f32 %v947, %v947
      %v962 = vsub.f32 %v956, %v960
      %v963 = vsub.f32 %v957, %v961
      %v964 = vadd.f32 %v962, 1e-12
      %v965 = vadd.f32 %v963, 1e-12
      %v966 = vrsqrt.pop %v964
      %v967 = vmul.f32 %v966, %v964
      %v968 = vmul.f32 %v967, %v966
      %v969 = vmul.f32 0.5, %v968
      %v970 = vsub.f32 1.5, %v969
      %v971 = vmul.f32 %v966, %v970
      %vm972 = vweird.f32 %v964
      %vm973 = vweird.f32 %v966
      %vm974 = vmor %vm972, %vm973
      %v975 = vsel %vm974, %v966, %v971
      %v976 = vrsqrt.pop %v965
      %v977 = vmul.f32 %v976, %v965
      %v978 = vmul.f32 %v977, %v976
      %v979 = vmul.f32 0.5, %v978
      %v980 = vsub.f32 1.5, %v979
      %v981 = vmul.f32 %v976, %v980
      %vm982 = vweird.f32 %v965
      %vm983 = vweird.f32 %v976
      %vm984 = vmor %vm982, %vm983
      %v985 = vsel %vm984, %v976, %v981
      %v986 = vmul.f32 %v958, %v975
      %v987 = vmul.f32 %v959, %v985
      %v988 = vperm.slane %v938, 0
      %v989 = vmul.f32 %v986, %v988
      %v990 = vmul.f32 %v987, %v988
      %v991 = vperm.slane %v939, 0
      %v992 = vadd.f32 %v989, %v991
      %v993 = vadd.f32 %v990, %v991
      %v994 = vld [vmem:[%s5] sm:$0xff]
      %v995 = vld [vmem:[%s5 + $0x8] sm:$0xff]
      %v996 = vld [vmem:[%s5 + $0x10] sm:$0xff]
      %v997 = vld [vmem:[%s5 + $0x18] sm:$0xff]
      %v998 = vld [vmem:[%s11 + $0x6] sm:$0x1]
      %v999 = vperm.slane %v998, 0
      %v1001 = vsel %vm541, %v992, 0
      %v1004 = vsel %vm541, %v993, 0
      %1006 = vmatpush.msra.mxu0 0.0
      %1007 = vmatpush.msra.mxu0 0.0
      %1008 = vmatpush.msra.mxu0 0.0
      %1009 = vmatpush.msra.mxu0 0.0
      %1010 = vmatpush.msra.mxu0 0.0
      %1011 = vmatpush.msra.mxu0 0.0
      %1012 = vmatpush.msra.mxu0 0.0
      %1013 = vmatpush.msra.mxu0 0.0
      %1014 = vmatpush.msra.mxu0 0.0
      %1015 = vmatpush.msra.mxu0 0.0
      %1016 = vmatpush.msra.mxu0 0.0
      %1017 = vmatpush.msra.mxu0 0.0
      %1018 = vmatpush.msra.mxu0 %v997
      %1019 = vmatpush.msra.mxu0 %v996
      %1020 = vmatpush.msra.mxu0 %v995
      %1021 = vmatpush.msra.mxu0 %v994
      %1022 = vmatmul.f32.gmra.mxu0 %v1001
      %v1023 = vpop.f32.mrf.mxu0
      %v1024 = vadd.f32 %v999, %v1023
      %1025 = vmatmul.f32.gmra.mxu0 %v1004
      %v1026 = vpop.f32.mrf.mxu0
      %v1027 = vadd.f32 %v999, %v1026
      %1028 = vdwg.mxu0
      %v1029 = vmul.f32 %v1024, %v1024
      %v1030 = vmul.f32 %v1027, %v1027
      %v1031 = vmul.f32 %v1024, %v1029
      %v1032 = vmul.f32 %v1027, %v1030
      %v1033 = vmul.f32 %v1031, 0.044715
      %v1034 = vmul.f32 %v1032, 0.044715
      %v1035 = vadd.f32 %v1024, %v1033
      %v1036 = vadd.f32 %v1027, %v1034
      %v1037 = vmul.f32 %v1035, 0.7978846
      %v1038 = vmul.f32 %v1036, 0.7978846
      %v1039 = vtanh.pop %v1037
      %v1040 = vtanh.pop %v1038
      %v1041 = vadd.f32 %v1039, 1.0
      %v1042 = vadd.f32 %v1040, 1.0
      %v1043 = vmul.f32 %v1041, 0.5
      %v1044 = vmul.f32 %v1042, 0.5
      %v1045 = vmul.f32 %v1024, %v1043
      %v1046 = vmul.f32 %v1027, %v1044
      %v1047 = vld [vmem:[%s6] sm:$0xff]
      %v1048 = vld [vmem:[%s6 + $0x8] sm:$0xff]
      %v1049 = vld [vmem:[%s6 + $0x10] sm:$0xff]
      %v1050 = vld [vmem:[%s6 + $0x18] sm:$0xff]
      %v1051 = vld [vmem:[%s6 + $0x20] sm:$0xff]
      %v1052 = vld [vmem:[%s6 + $0x28] sm:$0xff]
      %v1053 = vld [vmem:[%s6 + $0x30] sm:$0xff]
      %v1054 = vld [vmem:[%s6 + $0x38] sm:$0xff]
      %v1056 = vsel %vm480, %v1045, 0
      %v1059 = vsel %vm480, %v1046, 0
      %1061 = vmatpush.msra.mxu0 0.0
      %1062 = vmatpush.msra.mxu0 0.0
      %1063 = vmatpush.msra.mxu0 0.0
      %1064 = vmatpush.msra.mxu0 0.0
      %1065 = vmatpush.msra.mxu0 0.0
      %1066 = vmatpush.msra.mxu0 0.0
      %1067 = vmatpush.msra.mxu0 0.0
      %1068 = vmatpush.msra.mxu0 0.0
      %1069 = vmatpush.msra.mxu0 %v1054
      %1070 = vmatpush.msra.mxu0 %v1053
      %1071 = vmatpush.msra.mxu0 %v1052
      %1072 = vmatpush.msra.mxu0 %v1051
      %1073 = vmatpush.msra.mxu0 %v1050
      %1074 = vmatpush.msra.mxu0 %v1049
      %1075 = vmatpush.msra.mxu0 %v1048
      %1076 = vmatpush.msra.mxu0 %v1047
      %1077 = vmatmul.f32.gmra.mxu0 %v1056
      %v1078 = vpop.f32.mrf.mxu0
      %v1079 = vadd.f32 0.0, %v1078
      %1080 = vmatmul.f32.gmra.mxu0 %v1059
      %v1081 = vpop.f32.mrf.mxu0
      %v1082 = vadd.f32 0.0, %v1081
      %1083 = vdwg.mxu0
      %v1084 = vadd.f32 %v936, %v1079
      %v1085 = vadd.f32 %v937, %v1082
      %v1086 = vld [vmem:[%s11 + $0x7] sm:$0x1]
      %v1087 = vperm.slane %v1086, 0
      %v1088 = vadd.f32 %v1084, %v1087
      %v1089 = vadd.f32 %v1085, %v1087
      %v1090 = vld [vmem:[%s11 + $0x8] sm:$0x1]
      %v1091 = vld [vmem:[%s11 + $0x9] sm:$0x1]
      %v1092 = vsel %vm541, %v1088, 0.0
      %1093 = vadd.xlane.f32.xlu0 %v1092
      %v1094 = vpop.xlane.xlu0 %1093
      %v1095 = vsel %vm541, %v1089, 0.0
      %1096 = vadd.xlane.f32.xlu0 %v1095
      %v1097 = vpop.xlane.xlu0 %1096
      %v1098 = vmul.f32 %v1094, %v554
      %v1099 = vmul.f32 %v1097, %v554
      %v1100 = vmul.f32 %v1088, %v1088
      %v1101 = vmul.f32 %v1089, %v1089
      %v1102 = vsel %vm541, %v1100, 0.0
      %1103 = vadd.xlane.f32.xlu0 %v1102
      %v1104 = vpop.xlane.xlu0 %1103
      %v1105 = vsel %vm541, %v1101, 0.0
      %1106 = vadd.xlane.f32.xlu0 %v1105
      %v1107 = vpop.xlane.xlu0 %1106
      %v1108 = vmul.f32 %v1104, %v554
      %v1109 = vmul.f32 %v1107, %v554
      %v1110 = vsub.f32 %v1088, %v1098
      %v1111 = vsub.f32 %v1089, %v1099
      %v1112 = vmul.f32 %v1098, %v1098
      %v1113 = vmul.f32 %v1099, %v1099
      %v1114 = vsub.f32 %v1108, %v1112
      %v1115 = vsub.f32 %v1109, %v1113
      %v1116 = vadd.f32 %v1114, 1e-12
      %v1117 = vadd.f32 %v1115, 1e-12
      %v1118 = vrsqrt.pop %v1116
      %v1119 = vmul.f32 %v1118, %v1116
      %v1120 = vmul.f32 %v1119, %v1118
      %v1121 = vmul.f32 0.5, %v1120
      %v1122 = vsub.f32 1.5, %v1121
      %v1123 = vmul.f32 %v1118, %v1122
      %vm1124 = vweird.f32 %v1116
      %vm1125 = vweird.f32 %v1118
      %vm1126 = vmor %vm1124, %vm1125
      %v1127 = vsel %vm1126, %v1118, %v1123
      %v1128 = vrsqrt.pop %v1117
      %v1129 = vmul.f32 %v1128, %v1117
      %v1130 = vmul.f32 %v1129, %v1128
      %v1131 = vmul.f32 0.5, %v1130
      %v1132 = vsub.f32 1.5, %v1131
      %v1133 = vmul.f32 %v1128, %v1132
      %vm1134 = vweird.f32 %v1117
      %vm1135 = vweird.f32 %v1128
      %vm1136 = vmor %vm1134, %vm1135
      %v1137 = vsel %vm1136, %v1128, %v1133
      %v1138 = vmul.f32 %v1110, %v1127
      %v1139 = vmul.f32 %v1111, %v1137
      %v1140 = vperm.slane %v1090, 0
      %v1141 = vmul.f32 %v1138, %v1140
      %v1142 = vmul.f32 %v1139, %v1140
      %v1143 = vperm.slane %v1091, 0
      %v1144 = vadd.f32 %v1141, %v1143
      %v1145 = vadd.f32 %v1142, %v1143
      %s1146 = scalar_lea.vmem %s3, 32
      %v1147 = vld [vmem:[%s1146] sm:$0xff]
      %v1148 = vld [vmem:[%s1146 + $0x8] sm:$0xff]
      %v1149 = vld [vmem:[%s1146 + $0x10] sm:$0xff]
      %v1150 = vld [vmem:[%s1146 + $0x18] sm:$0xff]
      %v1151 = vld [vmem:[%s11 + $0xa] sm:$0x1]
      %v1152 = vperm.slane %v1151, 0
      %v1154 = vsel %vm541, %v1144, 0
      %v1157 = vsel %vm541, %v1145, 0
      %1159 = vmatpush.msra.mxu0 0.0
      %1160 = vmatpush.msra.mxu0 0.0
      %1161 = vmatpush.msra.mxu0 0.0
      %1162 = vmatpush.msra.mxu0 0.0
      %1163 = vmatpush.msra.mxu0 0.0
      %1164 = vmatpush.msra.mxu0 0.0
      %1165 = vmatpush.msra.mxu0 0.0
      %1166 = vmatpush.msra.mxu0 0.0
      %1167 = vmatpush.msra.mxu0 0.0
      %1168 = vmatpush.msra.mxu0 0.0
      %1169 = vmatpush.msra.mxu0 0.0
      %1170 = vmatpush.msra.mxu0 0.0
      %1171 = vmatpush.msra.mxu0 %v1150
      %1172 = vmatpush.msra.mxu0 %v1149
      %1173 = vmatpush.msra.mxu0 %v1148
      %1174 = vmatpush.msra.mxu0 %v1147
      %1175 = vmatmul.f32.gmra.mxu0 %v1154
      %v1176 = vpop.f32.mrf.mxu0
      %v1177 = vadd.f32 %v1152, %v1176
      %1178 = vmatmul.f32.gmra.mxu0 %v1157
      %v1179 = vpop.f32.mrf.mxu0
      %v1180 = vadd.f32 %v1152, %v1179
      %1181 = vdwg.mxu0
      %1184 = vrot.lane.b32.xlu0 %v1177, 96
      %v1185 = vpop.permute.xlu0 %1184
      %1186 = vrot.lane.b32.xlu0 %v1180, 96
      %v1187 = vpop.permute.xlu0 %1186
      %v1188 = vsel %vm644, %v1177, 0
      %v1190 = vsel %vm644, %v1180, 0
      %v1192 = vsel %vm644, %v1185, 0
      %v1194 = vsel %vm644, %v1187, 0
      %1196 = vmatpush.xpose.msra.mxu0 0.0
      %1197 = vmatpush.xpose.msra.mxu0 0.0
      %1198 = vmatpush.xpose.msra.mxu0 0.0
      %1199 = vmatpush.xpose.msra.mxu0 0.0
      %1200 = vmatpush.xpose.msra.mxu0 0.0
      %1201 = vmatpush.xpose.msra.mxu0 0.0
      %1202 = vmatpush.xpose.msra.mxu0 0.0
      %1203 = vmatpush.xpose.msra.mxu0 0.0
      %1204 = vmatpush.xpose.msra.mxu0 0.0
      %1205 = vmatpush.xpose.msra.mxu0 0.0
      %1206 = vmatpush.xpose.msra.mxu0 0.0
      %1207 = vmatpush.xpose.msra.mxu0 0.0
      %1208 = vmatpush.xpose.msra.mxu0 0.0
      %1209 = vmatpush.xpose.msra.mxu0 0.0
      %1210 = vmatpush.xpose.msra.mxu0 %v1194
      %1211 = vmatpush.xpose.msra.mxu0 %v1192
      %1212 = vmatmul.f32.gmra.mxu0 %v1188
      %v1213 = vpop.f32.mrf.mxu0
      %v1214 = vadd.f32 0.0, %v1213
      %1215 = vmatmul.f32.gmra.mxu0 %v1190
      %v1216 = vpop.f32.mrf.mxu0
      %v1217 = vadd.f32 0.0, %v1216
      %1218 = vdwg.mxu0
      %v1219 = vmul.f32 %v1214, 0.25
      %v1220 = vmul.f32 %v1217, 0.25
      %v1221 = vadd.f32 %v1219, %v538
      %v1222 = vadd.f32 %v1220, %v538
      %v1223 = vsel %vm644, %v1221, -inf
      %1224 = vmax.xlane.f32.xlu0 %v1223
      %v1225 = vpop.xlane.xlu0 %1224
      %v1226 = vsel %vm644, %v1222, -inf
      %1227 = vmax.xlane.f32.xlu0 %v1226
      %v1228 = vpop.xlane.xlu0 %1227
      %v1229 = vsub.f32 %v1221, %v1225
      %v1230 = vsub.f32 %v1222, %v1228
      %v1231 = vmul.f32 %v1229, 1.442695
      %v1232 = vpow.pop %v1231
      %v1233 = vmul.f32 %v1230, 1.442695
      %v1234 = vpow.pop %v1233
      %v1235 = vsel %vm644, %v1232, 0.0
      %1236 = vadd.xlane.f32.xlu0 %v1235
      %v1237 = vpop.xlane.xlu0 %1236
      %v1238 = vsel %vm644, %v1234, 0.0
      %1239 = vadd.xlane.f32.xlu0 %v1238
      %v1240 = vpop.xlane.xlu0 %1239
      %v1241 = vrcp.pop %v1237
      %v1242 = vmul.f32 %v1237, %v1241
      %v1243 = vsub.f32 1.0, %v1242
      %v1244 = vmul.f32 %v1241, %v1243
      %v1245 = vadd.f32 %v1241, %v1244
      %vm1246 = vweird.f32 %v1237
      %vm1247 = vweird.f32 %v1241
      %vm1248 = vmor %vm1246, %vm1247
      %v1249 = vsel %vm1248, %v1241, %v1245
      %v1250 = vand.u32 2147483647, %v1237
      %vm1251 = vcmp.eq.f32.partialorder %v1250, 8.507059e+37
      %v1252 = vand.u32 %v1237, 2147483648
      %v1253 = vor.u32 1.1754944e-38, %v1252
      %v1254 = vsel %vm1251, %v1253, %v1249
      %v1255 = vmul.f32 %v1232, %v1254
      %v1256 = vrcp.pop %v1240
      %v1257 = vmul.f32 %v1240, %v1256
      %v1258 = vsub.f32 1.0, %v1257
      %v1259 = vmul.f32 %v1256, %v1258
      %v1260 = vadd.f32 %v1256, %v1259
      %vm1261 = vweird.f32 %v1240
      %vm1262 = vweird.f32 %v1256
      %vm1263 = vmor %vm1261, %vm1262
      %v1264 = vsel %vm1263, %v1256, %v1260
      %v1265 = vand.u32 2147483647, %v1240
      %vm1266 = vcmp.eq.f32.partialorder %v1265, 8.507059e+37
      %v1267 = vand.u32 %v1240, 2147483648
      %v1268 = vor.u32 1.1754944e-38, %v1267
      %v1269 = vsel %vm1266, %v1268, %v1264
      %v1270 = vmul.f32 %v1234, %v1269
      %1271 = vrot.lane.b32.xlu0 %v1177, 64
      %v1272 = vpop.permute.xlu0 %1271
      %1273 = vrot.lane.b32.xlu0 %v1180, 64
      %v1274 = vpop.permute.xlu0 %1273
      %v1278 = vsel %vm644, %v1255, 0
      %v1281 = vsel %vm644, %v1270, 0
      %1283 = vmatpush.msra.mxu0 0.0
      %1284 = vmatpush.msra.mxu0 0.0
      %1285 = vmatpush.msra.mxu0 0.0
      %1286 = vmatpush.msra.mxu0 0.0
      %1287 = vmatpush.msra.mxu0 0.0
      %1288 = vmatpush.msra.mxu0 0.0
      %1289 = vmatpush.msra.mxu0 0.0
      %1290 = vmatpush.msra.mxu0 0.0
      %1291 = vmatpush.msra.mxu0 0.0
      %1292 = vmatpush.msra.mxu0 0.0
      %1293 = vmatpush.msra.mxu0 0.0
      %1294 = vmatpush.msra.mxu0 0.0
      %1295 = vmatpush.msra.mxu0 0.0
      %1296 = vmatpush.msra.mxu0 0.0
      %1297 = vmatpush.msra.mxu0 %v1274
      %1298 = vmatpush.msra.mxu0 %v1272
      %1299 = vmatmul.f32.gmra.mxu0 %v1278
      %v1300 = vpop.f32.mrf.mxu0
      %v1301 = vadd.f32 0.0, %v1300
      %1302 = vmatmul.f32.gmra.mxu0 %v1281
      %v1303 = vpop.f32.mrf.mxu0
      %v1304 = vadd.f32 0.0, %v1303
      %1305 = vdwg.mxu0
      %1306 = vrot.lane.b32.xlu0 %v1177, 112
      %v1307 = vpop.permute.xlu0 %1306
      %1308 = vrot.lane.b32.xlu0 %v1180, 112
      %v1309 = vpop.permute.xlu0 %1308
      %1310 = vrot.lane.b32.xlu0 %v1177, 80
      %v1311 = vpop.permute.xlu0 %1310
      %1312 = vrot.lane.b32.xlu0 %v1180, 80
      %v1313 = vpop.permute.xlu0 %1312
      %v1314 = vsel %vm644, %v1307, 0
      %v1316 = vsel %vm644, %v1309, 0
      %v1318 = vsel %vm644, %v1311, 0
      %v1320 = vsel %vm644, %v1313, 0
      %1322 = vmatpush.xpose.msra.mxu0 0.0
      %1323 = vmatpush.xpose.msra.mxu0 0.0
      %1324 = vmatpush.xpose.msra.mxu0 0.0
      %1325 = vmatpush.xpose.msra.mxu0 0.0
      %1326 = vmatpush.xpose.msra.mxu0 0.0
      %1327 = vmatpush.xpose.msra.mxu0 0.0
      %1328 = vmatpush.xpose.msra.mxu0 0.0
      %1329 = vmatpush.xpose.msra.mxu0 0.0
      %1330 = vmatpush.xpose.msra.mxu0 0.0
      %1331 = vmatpush.xpose.msra.mxu0 0.0
      %1332 = vmatpush.xpose.msra.mxu0 0.0
      %1333 = vmatpush.xpose.msra.mxu0 0.0
      %1334 = vmatpush.xpose.msra.mxu0 0.0
      %1335 = vmatpush.xpose.msra.mxu0 0.0
      %1336 = vmatpush.xpose.msra.mxu0 %v1320
      %1337 = vmatpush.xpose.msra.mxu0 %v1318
      %1338 = vmatmul.f32.gmra.mxu0 %v1314
      %v1339 = vpop.f32.mrf.mxu0
      %v1340 = vadd.f32 0.0, %v1339
      %1341 = vmatmul.f32.gmra.mxu0 %v1316
      %v1342 = vpop.f32.mrf.mxu0
      %v1343 = vadd.f32 0.0, %v1342
      %1344 = vdwg.mxu0
      %v1345 = vmul.f32 %v1340, 0.25
      %v1346 = vmul.f32 %v1343, 0.25
      %v1347 = vadd.f32 %v1345, %v538
      %v1348 = vadd.f32 %v1346, %v538
      %v1349 = vsel %vm644, %v1347, -inf
      %1350 = vmax.xlane.f32.xlu0 %v1349
      %v1351 = vpop.xlane.xlu0 %1350
      %v1352 = vsel %vm644, %v1348, -inf
      %1353 = vmax.xlane.f32.xlu0 %v1352
      %v1354 = vpop.xlane.xlu0 %1353
      %v1355 = vsub.f32 %v1347, %v1351
      %v1356 = vsub.f32 %v1348, %v1354
      %v1357 = vmul.f32 %v1355, 1.442695
      %v1358 = vpow.pop %v1357
      %v1359 = vmul.f32 %v1356, 1.442695
      %v1360 = vpow.pop %v1359
      %v1361 = vsel %vm644, %v1358, 0.0
      %1362 = vadd.xlane.f32.xlu0 %v1361
      %v1363 = vpop.xlane.xlu0 %1362
      %v1364 = vsel %vm644, %v1360, 0.0
      %1365 = vadd.xlane.f32.xlu0 %v1364
      %v1366 = vpop.xlane.xlu0 %1365
      %v1367 = vrcp.pop %v1363
      %v1368 = vmul.f32 %v1363, %v1367
      %v1369 = vsub.f32 1.0, %v1368
      %v1370 = vmul.f32 %v1367, %v1369
      %v1371 = vadd.f32 %v1367, %v1370
      %vm1372 = vweird.f32 %v1363
      %vm1373 = vweird.f32 %v1367
      %vm1374 = vmor %vm1372, %vm1373
      %v1375 = vsel %vm1374, %v1367, %v1371
      %v1376 = vand.u32 2147483647, %v1363
      %vm1377 = vcmp.eq.f32.partialorder %v1376, 8.507059e+37
      %v1378 = vand.u32 %v1363, 2147483648
      %v1379 = vor.u32 1.1754944e-38, %v1378
      %v1380 = vsel %vm1377, %v1379, %v1375
      %v1381 = vmul.f32 %v1358, %v1380
      %v1382 = vrcp.pop %v1366
      %v1383 = vmul.f32 %v1366, %v1382
      %v1384 = vsub.f32 1.0, %v1383
      %v1385 = vmul.f32 %v1382, %v1384
      %v1386 = vadd.f32 %v1382, %v1385
      %vm1387 = vweird.f32 %v1366
      %vm1388 = vweird.f32 %v1382
      %vm1389 = vmor %vm1387, %vm1388
      %v1390 = vsel %vm1389, %v1382, %v1386
      %v1391 = vand.u32 2147483647, %v1366
      %vm1392 = vcmp.eq.f32.partialorder %v1391, 8.507059e+37
      %v1393 = vand.u32 %v1366, 2147483648
      %v1394 = vor.u32 1.1754944e-38, %v1393
      %v1395 = vsel %vm1392, %v1394, %v1390
      %v1396 = vmul.f32 %v1360, %v1395
      %1397 = vrot.lane.b32.xlu0 %v1177, 48
      %v1398 = vpop.permute.xlu0 %1397
      %1399 = vrot.lane.b32.xlu0 %v1180, 48
      %v1400 = vpop.permute.xlu0 %1399
      %v1404 = vsel %vm644, %v1381, 0
      %v1407 = vsel %vm644, %v1396, 0
      %1409 = vmatpush.msra.mxu0 0.0
      %1410 = vmatpush.msra.mxu0 0.0
      %1411 = vmatpush.msra.mxu0 0.0
      %1412 = vmatpush.msra.mxu0 0.0
      %1413 = vmatpush.msra.mxu0 0.0
      %1414 = vmatpush.msra.mxu0 0.0
      %1415 = vmatpush.msra.mxu0 0.0
      %1416 = vmatpush.msra.mxu0 0.0
      %1417 = vmatpush.msra.mxu0 0.0
      %1418 = vmatpush.msra.mxu0 0.0
      %1419 = vmatpush.msra.mxu0 0.0
      %1420 = vmatpush.msra.mxu0 0.0
      %1421 = vmatpush.msra.mxu0 0.0
      %1422 = vmatpush.msra.mxu0 0.0
      %1423 = vmatpush.msra.mxu0 %v1400
      %1424 = vmatpush.msra.mxu0 %v1398
      %1425 = vmatmul.f32.gmra.mxu0 %v1404
      %v1426 = vpop.f32.mrf.mxu0
      %v1427 = vadd.f32 0.0, %v1426
      %1428 = vmatmul.f32.gmra.mxu0 %v1407
      %v1429 = vpop.f32.mrf.mxu0
      %v1430 = vadd.f32 0.0, %v1429
      %1431 = vdwg.mxu0
      %1434 = vrot.lane.b32.xlu0 %v1427, 16
      %v1435 = vpop.permute.xlu0 %1434
      %1436 = vrot.lane.b32.xlu0 %v1430, 16
      %v1437 = vpop.permute.xlu0 %1436
      %v1440 = vsel %vm644, %v1301, %v1435
      %v1441 = vsel %vm644, %v1304, %v1437
      %s1442 = scalar_lea.vmem %s4, 32
      %v1443 = vld [vmem:[%s1442] sm:$0xff]
      %v1444 = vld [vmem:[%s1442 + $0x8] sm:$0xff]
      %v1445 = vld [vmem:[%s1442 + $0x10] sm:$0xff]
      %v1446 = vld [vmem:[%s1442 + $0x18] sm:$0xff]
      %v1448 = vsel %vm541, %v1440, 0
      %v1451 = vsel %vm541, %v1441, 0
      %1453 = vmatpush.msra.mxu0 0.0
      %1454 = vmatpush.msra.mxu0 0.0
      %1455 = vmatpush.msra.mxu0 0.0
      %1456 = vmatpush.msra.mxu0 0.0
      %1457 = vmatpush.msra.mxu0 0.0
      %1458 = vmatpush.msra.mxu0 0.0
      %1459 = vmatpush.msra.mxu0 0.0
      %1460 = vmatpush.msra.mxu0 0.0
      %1461 = vmatpush.msra.mxu0 0.0
      %1462 = vmatpush.msra.mxu0 0.0
      %1463 = vmatpush.msra.mxu0 0.0
      %1464 = vmatpush.msra.mxu0 0.0
      %1465 = vmatpush.msra.mxu0 %v1446
      %1466 = vmatpush.msra.mxu0 %v1445
      %1467 = vmatpush.msra.mxu0 %v1444
      %1468 = vmatpush.msra.mxu0 %v1443
      %1469 = vmatmul.f32.gmra.mxu0 %v1448
      %v1470 = vpop.f32.mrf.mxu0
      %v1471 = vadd.f32 0.0, %v1470
      %1472 = vmatmul.f32.gmra.mxu0 %v1451
      %v1473 = vpop.f32.mrf.mxu0
      %v1474 = vadd.f32 0.0, %v1473
      %1475 = vdwg.mxu0
      %v1476 = vadd.f32 %v1088, %v1471
      %v1477 = vadd.f32 %v1089, %v1474
      %v1478 = vld [vmem:[%s11 + $0xb] sm:$0x1]
      %v1479 = vperm.slane %v1478, 0
      %v1480 = vadd.f32 %v1476, %v1479
      %v1481 = vadd.f32 %v1477, %v1479
      %v1482 = vld [vmem:[%s11 + $0xc] sm:$0x1]
      %v1483 = vld [vmem:[%s11 + $0xd] sm:$0x1]
      %v1484 = vsel %vm541, %v1480, 0.0
      %1485 = vadd.xlane.f32.xlu0 %v1484
      %v1486 = vpop.xlane.xlu0 %1485
      %v1487 = vsel %vm541, %v1481, 0.0
      %1488 = vadd.xlane.f32.xlu0 %v1487
      %v1489 = vpop.xlane.xlu0 %1488
      %v1490 = vmul.f32 %v1486, %v554
      %v1491 = vmul.f32 %v1489, %v554
      %v1492 = vmul.f32 %v1480, %v1480
      %v1493 = vmul.f32 %v1481, %v1481
      %v1494 = vsel %vm541, %v1492, 0.0
      %1495 = vadd.xlane.f32.xlu0 %v1494
      %v1496 = vpop.xlane.xlu0 %1495
      %v1497 = vsel %vm541, %v1493, 0.0
      %1498 = vadd.xlane.f32.xlu0 %v1497
      %v1499 = vpop.xlane.xlu0 %1498
      %v1500 = vmul.f32 %v1496, %v554
      %v1501 = vmul.f32 %v1499, %v554
      %v1502 = vsub.f32 %v1480, %v1490
      %v1503 = vsub.f32 %v1481, %v1491
      %v1504 = vmul.f32 %v1490, %v1490
      %v1505 = vmul.f32 %v1491, %v1491
      %v1506 = vsub.f32 %v1500, %v1504
      %v1507 = vsub.f32 %v1501, %v1505
      %v1508 = vadd.f32 %v1506, 1e-12
      %v1509 = vadd.f32 %v1507, 1e-12
      %v1510 = vrsqrt.pop %v1508
      %v1511 = vmul.f32 %v1510, %v1508
      %v1512 = vmul.f32 %v1511, %v1510
      %v1513 = vmul.f32 0.5, %v1512
      %v1514 = vsub.f32 1.5, %v1513
      %v1515 = vmul.f32 %v1510, %v1514
      %vm1516 = vweird.f32 %v1508
      %vm1517 = vweird.f32 %v1510
      %vm1518 = vmor %vm1516, %vm1517
      %v1519 = vsel %vm1518, %v1510, %v1515
      %v1520 = vrsqrt.pop %v1509
      %v1521 = vmul.f32 %v1520, %v1509
      %v1522 = vmul.f32 %v1521, %v1520
      %v1523 = vmul.f32 0.5, %v1522
      %v1524 = vsub.f32 1.5, %v1523
      %v1525 = vmul.f32 %v1520, %v1524
      %vm1526 = vweird.f32 %v1509
      %vm1527 = vweird.f32 %v1520
      %vm1528 = vmor %vm1526, %vm1527
      %v1529 = vsel %vm1528, %v1520, %v1525
      %v1530 = vmul.f32 %v1502, %v1519
      %v1531 = vmul.f32 %v1503, %v1529
      %v1532 = vperm.slane %v1482, 0
      %v1533 = vmul.f32 %v1530, %v1532
      %v1534 = vmul.f32 %v1531, %v1532
      %v1535 = vperm.slane %v1483, 0
      %v1536 = vadd.f32 %v1533, %v1535
      %v1537 = vadd.f32 %v1534, %v1535
      %s1538 = scalar_lea.vmem %s5, 32
      %v1539 = vld [vmem:[%s1538] sm:$0xff]
      %v1540 = vld [vmem:[%s1538 + $0x8] sm:$0xff]
      %v1541 = vld [vmem:[%s1538 + $0x10] sm:$0xff]
      %v1542 = vld [vmem:[%s1538 + $0x18] sm:$0xff]
      %v1543 = vld [vmem:[%s11 + $0xe] sm:$0x1]
      %v1544 = vperm.slane %v1543, 0
      %v1546 = vsel %vm541, %v1536, 0
      %v1549 = vsel %vm541, %v1537, 0
      %1551 = vmatpush.msra.mxu0 0.0
      %1552 = vmatpush.msra.mxu0 0.0
      %1553 = vmatpush.msra.mxu0 0.0
      %1554 = vmatpush.msra.mxu0 0.0
      %1555 = vmatpush.msra.mxu0 0.0
      %1556 = vmatpush.msra.mxu0 0.0
      %1557 = vmatpush.msra.mxu0 0.0
      %1558 = vmatpush.msra.mxu0 0.0
      %1559 = vmatpush.msra.mxu0 0.0
      %1560 = vmatpush.msra.mxu0 0.0
      %1561 = vmatpush.msra.mxu0 0.0
      %1562 = vmatpush.msra.mxu0 0.0
      %1563 = vmatpush.msra.mxu0 %v1542
      %1564 = vmatpush.msra.mxu0 %v1541
      %1565 = vmatpush.msra.mxu0 %v1540
      %1566 = vmatpush.msra.mxu0 %v1539
      %1567 = vmatmul.f32.gmra.mxu0 %v1546
      %v1568 = vpop.f32.mrf.mxu0
      %v1569 = vadd.f32 %v1544, %v1568
      %1570 = vmatmul.f32.gmra.mxu0 %v1549
      %v1571 = vpop.f32.mrf.mxu0
      %v1572 = vadd.f32 %v1544, %v1571
      %1573 = vdwg.mxu0
      %v1574 = vmul.f32 %v1569, %v1569
      %v1575 = vmul.f32 %v1572, %v1572
      %v1576 = vmul.f32 %v1569, %v1574
      %v1577 = vmul.f32 %v1572, %v1575
      %v1578 = vmul.f32 %v1576, 0.044715
      %v1579 = vmul.f32 %v1577, 0.044715
      %v1580 = vadd.f32 %v1569, %v1578
      %v1581 = vadd.f32 %v1572, %v1579
      %v1582 = vmul.f32 %v1580, 0.7978846
      %v1583 = vmul.f32 %v1581, 0.7978846
      %v1584 = vtanh.pop %v1582
      %v1585 = vtanh.pop %v1583
      %v1586 = vadd.f32 %v1584, 1.0
      %v1587 = vadd.f32 %v1585, 1.0
      %v1588 = vmul.f32 %v1586, 0.5
      %v1589 = vmul.f32 %v1587, 0.5
      %v1590 = vmul.f32 %v1569, %v1588
      %v1591 = vmul.f32 %v1572, %v1589
      %s1592 = scalar_lea.vmem %s6, 64
      %v1593 = vld [vmem:[%s1592] sm:$0xff]
      %v1594 = vld [vmem:[%s1592 + $0x8] sm:$0xff]
      %v1595 = vld [vmem:[%s1592 + $0x10] sm:$0xff]
      %v1596 = vld [vmem:[%s1592 + $0x18] sm:$0xff]
      %v1597 = vld [vmem:[%s1592 + $0x20] sm:$0xff]
      %v1598 = vld [vmem:[%s1592 + $0x28] sm:$0xff]
      %v1599 = vld [vmem:[%s1592 + $0x30] sm:$0xff]
      %v1600 = vld [vmem:[%s1592 + $0x38] sm:$0xff]
      %v1602 = vsel %vm480, %v1590, 0
      %v1605 = vsel %vm480, %v1591, 0
      %1607 = vmatpush.msra.mxu0 0.0
      %1608 = vmatpush.msra.mxu0 0.0
      %1609 = vmatpush.msra.mxu0 0.0
      %1610 = vmatpush.msra.mxu0 0.0
      %1611 = vmatpush.msra.mxu0 0.0
      %1612 = vmatpush.msra.mxu0 0.0
      %1613 = vmatpush.msra.mxu0 0.0
      %1614 = vmatpush.msra.mxu0 0.0
      %1615 = vmatpush.msra.mxu0 %v1600
      %1616 = vmatpush.msra.mxu0 %v1599
      %1617 = vmatpush.msra.mxu0 %v1598
      %1618 = vmatpush.msra.mxu0 %v1597
      %1619 = vmatpush.msra.mxu0 %v1596
      %1620 = vmatpush.msra.mxu0 %v1595
      %1621 = vmatpush.msra.mxu0 %v1594
      %1622 = vmatpush.msra.mxu0 %v1593
      %1623 = vmatmul.f32.gmra.mxu0 %v1602
      %v1624 = vpop.f32.mrf.mxu0
      %1625 = vmatmul.f32.gmra.mxu0 %v1605
      %v1626 = vpop.f32.mrf.mxu0
      %v1627 = vadd.f32 0.0, %v1626
      %1628 = vdwg.mxu0
      %v1629 = vadd.f32 %v1481, %v1627
      %v1630 = vld [vmem:[%s11 + $0xf] sm:$0x1]
      %v1631 = vperm.slane %v1630, 0
      %v1632 = vadd.f32 %v1629, %v1631
      %v1633 = vld [vmem:[%s11 + $0x10] sm:$0x1]
      %v1634 = vld [vmem:[%s11 + $0x11] sm:$0x1]
      %v1635 = vsel %vm541, %v1632, 0.0
      %1636 = vadd.xlane.f32.xlu0 %v1635
      %v1637 = vpop.xlane.xlu0 %1636
      %v1638 = vmul.f32 %v1637, %v554
      %v1639 = vmul.f32 %v1632, %v1632
      %v1640 = vsel %vm541, %v1639, 0.0
      %1641 = vadd.xlane.f32.xlu0 %v1640
      %v1642 = vpop.xlane.xlu0 %1641
      %v1643 = vmul.f32 %v1642, %v554
      %v1644 = vsub.f32 %v1632, %v1638
      %v1645 = vmul.f32 %v1638, %v1638
      %v1646 = vsub.f32 %v1643, %v1645
      %v1647 = vadd.f32 %v1646, 1e-12
      %v1648 = vrsqrt.pop %v1647
      %v1649 = vmul.f32 %v1648, %v1647
      %v1650 = vmul.f32 %v1649, %v1648
      %v1651 = vmul.f32 0.5, %v1650
      %v1652 = vsub.f32 1.5, %v1651
      %v1653 = vmul.f32 %v1648, %v1652
      %vm1654 = vweird.f32 %v1647
      %vm1655 = vweird.f32 %v1648
      %vm1656 = vmor %vm1654, %vm1655
      %v1657 = vsel %vm1656, %v1648, %v1653
      %v1658 = vmul.f32 %v1644, %v1657
      %v1659 = vperm.slane %v1633, 0
      %v1660 = vmul.f32 %v1658, %v1659
      %v1661 = vperm.slane %v1634, 0
      %v1662 = vadd.f32 %v1660, %v1661
      %v1663 = vld [vmem:[%s7] sm:$0xff]
      %v1664 = vld [vmem:[%s7 + $0x8] sm:$0xff]
      %v1665 = vld [vmem:[%s7 + $0x10] sm:$0xff]
      %v1666 = vld [vmem:[%s7 + $0x18] sm:$0xff]
      %v1667 = vld [vmem:[%s11 + $0x12] sm:$0x1]
      %v1668 = vperm.slane %v1667, 0
      %v1670 = vsel %vm541, %v1662, 0
      %1672 = vmatpush.msra.mxu0 0.0
      %1673 = vmatpush.msra.mxu0 0.0
      %1674 = vmatpush.msra.mxu0 0.0
      %1675 = vmatpush.msra.mxu0 0.0
      %1676 = vmatpush.msra.mxu0 0.0
      %1677 = vmatpush.msra.mxu0 0.0
      %1678 = vmatpush.msra.mxu0 0.0
      %1679 = vmatpush.msra.mxu0 0.0
      %1680 = vmatpush.msra.mxu0 0.0
      %1681 = vmatpush.msra.mxu0 0.0
      %1682 = vmatpush.msra.mxu0 0.0
      %1683 = vmatpush.msra.mxu0 0.0
      %1684 = vmatpush.msra.mxu0 %v1666
      %1685 = vmatpush.msra.mxu0 %v1665
      %1686 = vmatpush.msra.mxu0 %v1664
      %1687 = vmatpush.msra.mxu0 %v1663
      %1688 = vmatmul.f32.gmra.mxu0 %v1670
      %v1689 = vpop.f32.mrf.mxu0
      %v1690 = vadd.f32 %v1668, %v1689
      %1691 = vdwg.mxu0
      %1692 = vst [vmem:[%s445] sm:$0xff] %v1690
      %v1693 = vld [vmem:[%s8] sm:$0xff]
      %v1694 = vld [vmem:[%s8 + $0x8] sm:$0xff]
      %v1695 = vld [vmem:[%s8 + $0x10] sm:$0xff]
      %v1696 = vld [vmem:[%s8 + $0x18] sm:$0xff]
      %v1697 = vld [vmem:[%s11 + $0x13] sm:$0x1]
      %v1698 = vperm.slane %v1697, 0
      %1699 = vmatpush.msra.mxu0 0.0
      %1700 = vmatpush.msra.mxu0 0.0
      %1701 = vmatpush.msra.mxu0 0.0
      %1702 = vmatpush.msra.mxu0 0.0
      %1703 = vmatpush.msra.mxu0 0.0
      %1704 = vmatpush.msra.mxu0 0.0
      %1705 = vmatpush.msra.mxu0 0.0
      %1706 = vmatpush.msra.mxu0 0.0
      %1707 = vmatpush.msra.mxu0 0.0
      %1708 = vmatpush.msra.mxu0 0.0
      %1709 = vmatpush.msra.mxu0 0.0
      %1710 = vmatpush.msra.mxu0 0.0
      %1711 = vmatpush.msra.mxu0 %v1696
      %1712 = vmatpush.msra.mxu0 %v1695
      %1713 = vmatpush.msra.mxu0 %v1694
      %1714 = vmatpush.msra.mxu0 %v1693
      %1715 = vmatmul.f32.gmra.mxu0 %v1670
      %v1716 = vpop.f32.mrf.mxu0
      %v1717 = vadd.f32 %v1698, %v1716
      %1718 = vdwg.mxu0
      %v1719 = vmax.f32 %v1717, 0.0
      %v1720 = vld [vmem:[%s9] sm:$0xff]
      %v1721 = vld [vmem:[%s9 + $0x8] sm:$0xff]
      %v1722 = vld [vmem:[%s9 + $0x10] sm:$0xff]
      %v1723 = vld [vmem:[%s9 + $0x18] sm:$0xff]
      %v1724 = vld [vmem:[%s11 + $0x14] sm:$0x1]
      %v1725 = vperm.slane %v1724, 0
      %v1727 = vsel %vm541, %v1719, 0
      %1729 = vmatpush.msra.mxu0 0.0
      %1730 = vmatpush.msra.mxu0 0.0
      %1731 = vmatpush.msra.mxu0 0.0
      %1732 = vmatpush.msra.mxu0 0.0
      %1733 = vmatpush.msra.mxu0 0.0
      %1734 = vmatpush.msra.mxu0 0.0
      %1735 = vmatpush.msra.mxu0 0.0
      %1736 = vmatpush.msra.mxu0 0.0
      %1737 = vmatpush.msra.mxu0 0.0
      %1738 = vmatpush.msra.mxu0 0.0
      %1739 = vmatpush.msra.mxu0 0.0
      %1740 = vmatpush.msra.mxu0 0.0
      %1741 = vmatpush.msra.mxu0 %v1723
      %1742 = vmatpush.msra.mxu0 %v1722
      %1743 = vmatpush.msra.mxu0 %v1721
      %1744 = vmatpush.msra.mxu0 %v1720
      %1745 = vmatmul.f32.gmra.mxu0 %v1727
      %v1746 = vpop.f32.mrf.mxu0
      %v1747 = vadd.f32 %v1725, %v1746
      %1748 = vdwg.mxu0
      %v1749 = vmax.f32 %v1747, 0.0
      %v1750 = vld [vmem:[%s10] sm:$0xff]
      %v1751 = vld [vmem:[%s10 + $0x8] sm:$0xff]
      %v1752 = vld [vmem:[%s10 + $0x10] sm:$0xff]
      %v1753 = vld [vmem:[%s10 + $0x18] sm:$0xff]
      %v1754 = vld [vmem:[%s11 + $0x15] sm:$0x1]
      %v1755 = vperm.slane %v1754, 0
      %v1757 = vsel %vm541, %v1749, 0
      %1759 = vmatpush.msra.mxu0 0.0
      %1760 = vmatpush.msra.mxu0 0.0
      %1761 = vmatpush.msra.mxu0 0.0
      %1762 = vmatpush.msra.mxu0 0.0
      %1763 = vmatpush.msra.mxu0 0.0
      %1764 = vmatpush.msra.mxu0 0.0
      %1765 = vmatpush.msra.mxu0 0.0
      %1766 = vmatpush.msra.mxu0 0.0
      %1767 = vmatpush.msra.mxu0 0.0
      %1768 = vmatpush.msra.mxu0 0.0
      %1769 = vmatpush.msra.mxu0 0.0
      %1770 = vmatpush.msra.mxu0 0.0
      %1771 = vmatpush.msra.mxu0 %v1753
      %1772 = vmatpush.msra.mxu0 %v1752
      %1773 = vmatpush.msra.mxu0 %v1751
      %1774 = vmatpush.msra.mxu0 %v1750
      %1775 = vmatmul.f32.gmra.mxu0 %v1757
      %v1776 = vpop.f32.mrf.mxu0
      %v1777 = vadd.f32 %v1755, %v1776
      %1778 = vdwg.mxu0
      %v1779 = vxor.u32 %v1777, 2147483648
      %v1780 = vmul.f32 %v1779, 1.442695
      %v1781 = vpow.pop %v1780
      %v1782 = vadd.f32 %v1781, 1.0
      %v1783 = vrcp.pop %v1782
      %v1784 = vmul.f32 %v1782, %v1783
      %v1785 = vsub.f32 1.0, %v1784
      %v1786 = vmul.f32 %v1783, %v1785
      %v1787 = vadd.f32 %v1783, %v1786
      %vm1788 = vweird.f32 %v1782
      %vm1789 = vweird.f32 %v1783
      %vm1790 = vmor %vm1788, %vm1789
      %v1791 = vsel %vm1790, %v1783, %v1787
      %v1792 = vand.u32 2147483647, %v1782
      %vm1793 = vcmp.eq.f32.partialorder %v1792, 8.507059e+37
      %v1794 = vand.u32 %v1782, 2147483648
      %v1795 = vor.u32 1.1754944e-38, %v1794
      %v1796 = vsel %vm1793, %v1795, %v1791
      %v1797 = vmul.f32 1.0, %v1796
      %1798 = vst [vmem:[%s449] sm:$0xff] %v1797
      %p1799 = scmp.lt.s32.totalorder %s25, 1
      %s1800 = scalar_select %p1799, %s25, 1
      %s1801 = smul.addr %s1800, 8
      %s1802 = scalar_lea.vmem %s12, %s1801
      %p1803 = scmp.lt.s32.totalorder %s25, 1
      %s1804 = scalar_select %p1803, %s25, 1
      %s1805 = smul.addr %s1804, 8
      %s1806 = scalar_lea.vmem %s13, %s1805
      // Predicated region
      $region69: #{inferencer_forward.1} parent=67 // pred_check
        %p1807 = pneg %p300
      $region70: #{inferencer_forward.1} parent=67 // pred_check_branch
        %1809 = sbr.rel (%p1807) target = $region72
      $region71: #{inferencer_forward.1} parent=67 // pred_region
        _
      $region72: #{inferencer_forward.1} parent=67 // pred_fallthru
        _
      // Predicated region
      $region73: #{inferencer_forward.1} parent=67 // pred_check
        %p1810 = pneg %p326
      $region74: #{inferencer_forward.1} parent=67 // pred_check_branch
        %1812 = sbr.rel (%p1810) target = $region76
      $region75: #{inferencer_forward.1} parent=67 // pred_region
        _
      $region76: #{inferencer_forward.1} parent=67 // pred_fallthru
        _
    $region68: #{inferencer_forward.1} parent=5 // pred_fallthru
      _
    %p1813 = scmp.le.s32.totalorder 2, %s20
    // Predicated region
    $region77: #{inferencer_forward.1} parent=5 // pred_check
      %p1814 = pneg %p1813
    $region78: #{inferencer_forward.1} parent=5 // pred_check_branch
      %1816 = sbr.rel (%p1814) target = $region80
    $region79: #{inferencer_forward.1} parent=5 // pred_region
      %s1817 = ssub.s32 %s20, 2
      // Predicated region
      $region81: #{inferencer_forward.1} parent=79 // pred_check
        %p1818 = pneg %p306
      $region82: #{inferencer_forward.1} parent=79 // pred_check_branch
        %1820 = sbr.rel (%p1818) target = $region84
      $region83: #{inferencer_forward.1} parent=79 // pred_region
        %p1821 = scmp.lt.s32.totalorder %s26, 1
        %s1822 = scalar_select %p1821, %s26, 1
        %s1823 = smul.addr %s1822, 8
        %s1824 = scalar_lea.vmem %s12, %s1823
      $region84: #{inferencer_forward.1} parent=79 // pred_fallthru
        _
      // Predicated region
      $region85: #{inferencer_forward.1} parent=79 // pred_check
        %p1825 = pneg %p332
      $region86: #{inferencer_forward.1} parent=79 // pred_check_branch
        %1827 = sbr.rel (%p1825) target = $region88
      $region87: #{inferencer_forward.1} parent=79 // pred_region
        %p1828 = scmp.lt.s32.totalorder %s26, 1
        %s1829 = scalar_select %p1828, %s26, 1
        %s1830 = smul.addr %s1829, 8
        %s1831 = scalar_lea.vmem %s13, %s1830
      $region88: #{inferencer_forward.1} parent=79 // pred_fallthru
        _
    $region80: #{inferencer_forward.1} parent=5 // pred_fallthru
      _
  $region6: #{inferencer_forward.1} parent=0 // loop_footer
    %s24 = sadd.s32 1, %s20
  $region7: #{inferencer_forward.1} parent=0 // loop_footer_branch
    %19 = sbr.rel target = $region3
  $region8: #{inferencer_forward.1} parent=0 // loop_exit
    _

</llo_original>
